<compile_context>
chip_gen: v6e
topology: v6e:2x2x1
jax: 0.10.0
libtpu: 0.0.40
codegen_flags: <defaults>
</compile_context>

<pallas_src>
import functools

import jax
import jax.numpy as jnp
from jax.experimental import pallas as pl
from jax.experimental.pallas import tpu as pltpu

_LANE = 128        # lane width: pad all feature dims to a multiple of this
_SUBLANE = 8       # sublane width: batch tiles are multiples of this
_MAX_TB = 1024     # largest batch tile (rows) per grid step -- sweep 1024..2048
_MIN_SPLIT = 256   # below this many rows, one tile is cheaper than an extra grid step


def _round_up(x: int, m: int) -> int:
    return (x + m - 1) // m * m


def _ceil_div(a: int, b: int) -> int:
    return -(-a // b)


def _choose_batch_tiling(batch: int) -> tuple[int, int]:
    """Return (tile_rows, padded_batch).

    Small batches run as a single tile (latency bound; an extra grid step only adds
    ~0.35 us of overhead).  Larger batches get an EVEN number of equally sized tiles
    so dimension_semantics=("parallel",) splits the batch across both v7x TensorCores.
    """
    bp = _round_up(batch, _SUBLANE)
    if bp <= _MIN_SPLIT:
        return bp, bp
    n_tiles = max(2, _ceil_div(bp, _MAX_TB))
    if n_tiles % 2:
        n_tiles += 1                      # even grid length for v7x megacore balance
    tb = _round_up(_ceil_div(bp, n_tiles), _SUBLANE)
    return tb, tb * n_tiles


def _fused_autoencoder_kernel(x_ref, w_ref, b_ref, o_ref, *, relu_flags, out_width):
    # x_ref: [TB, PAD] f32   w_ref: [L, PAD, PAD] bf16   b_ref: [L, 1, PAD] f32
    # o_ref: [TB, out_width] f32
    h = x_ref[...]                                         # f32
    for i, relu in enumerate(relu_flags):
        # bf16 operands on the MXU, f32 accumulation; bias add / ReLU in f32.
        h = jnp.dot(h.astype(jnp.bfloat16), w_ref[i],
                    preferred_element_type=jnp.float32) + b_ref[i]
        if relu:
            h = jnp.maximum(h, 0.0)
    # Write the unpadded feature width directly (no wrapper-side slice copy).
    o_ref[...] = h[:, :out_width].astype(o_ref.dtype)


def make_autoencoder_params(in_size: int, latent_size: int, key):
    """PyTorch-style U(-1/sqrt(fan_in), 1/sqrt(fan_in)) init.

    Returns the raw per-layer params (for the plain-JAX reference) and the
    128-padded stacked weight (bf16) / bias (f32) buffers the fused kernel consumes.
    """
    enc_dims = [in_size, in_size // 2, in_size // 3, in_size // 4,
                in_size // 5, in_size // 6, latent_size]
    dec_dims = list(reversed(enc_dims))
    all_dims = enc_dims + dec_dims[1:]            # 13 sizes -> 12 layers
    n_layers = len(all_dims) - 1                  # 12
    pad = _round_up(max(all_dims), _LANE)         # lane-dense feature width (128 here)

    def init_layer(k, fan_in, fan_out):
        kw, kb = jax.random.split(k)
        bound = 1.0 / jnp.sqrt(jnp.float32(fan_in))
        w = jax.random.uniform(kw, (fan_in, fan_out), jnp.float32, -bound, bound)
        b = jax.random.uniform(kb, (fan_out,), jnp.float32, -bound, bound)
        return w, b

    keys = jax.random.split(key, n_layers)
    layers = [init_layer(keys[i], all_dims[i], all_dims[i + 1])
              for i in range(n_layers)]

    # Zero-pad each weight to (pad, pad) / bias to (1, pad), stack, store weights bf16.
    # Zero rows/cols keep the padded math exact (padded activation cols stay 0).
    w_stack = jnp.stack([
        jnp.zeros((pad, pad), jnp.float32).at[:w.shape[0], :w.shape[1]].set(w)
        for (w, _) in layers
    ]).astype(jnp.bfloat16)
    b_stack = jnp.stack([
        jnp.zeros((1, pad), jnp.float32).at[0, :b.shape[0]].set(b)
        for (_, b) in layers
    ])

    # ReLU after every layer except the last encoder layer (latent) and the final
    # decoder layer -- exactly the nn.Sequential layout of the PyTorch module.
    relu_flags = tuple([True] * 5 + [False] + [True] * 5 + [False])

    return {
        "layers": layers,          # unpadded f32, for the reference path
        "w_stack": w_stack,        # [12, pad, pad] bf16
        "b_stack": b_stack,        # [12, 1, pad]  f32
        "pad": pad,
        "relu_flags": relu_flags,
        "in_size": in_size,
    }


def autoencoder_forward(params, x):
    """Fused 12-layer forward in one pallas_call. x: [batch, in_size] f32."""
    batch, in_size = x.shape
    pad = params["pad"]
    relu_flags = params["relu_flags"]
    w_stack = params["w_stack"]
    b_stack = params["b_stack"]
    n_layers = w_stack.shape[0]

    tb, bp = _choose_batch_tiling(batch)

    # Single jnp.pad (feature-dim zeros required for exactness; row padding only if
    # the batch isn't already a tile multiple).  No zeros-buffer + scatter copy.
    if bp != batch or pad != in_size:
        xp = jnp.pad(x, ((0, bp - batch), (0, pad - in_size)))
    else:
        xp = x

    # VMEM guard (review item): the resident weight stack costs n_layers*pad*pad*2 B.
    # At pad=128 that's ~0.4 MB; if the model grows (pad >= 1024), raise the scoped
    # VMEM limit so the fused design still fits (v7x has 64 MiB physical).
    # TODO(synk): for very large pad, stream weights per layer (layer grid axis /
    # pltpu.emit_pipeline) instead of keeping the whole stack resident.
    weight_bytes = w_stack.size * w_stack.dtype.itemsize
    vmem_limit = None
    if weight_bytes > (8 << 20):
        vmem_limit = min(3 * weight_bytes + (16 << 20), 60 << 20)

    out = pl.pallas_call(
        functools.partial(_fused_autoencoder_kernel,
                          relu_flags=relu_flags, out_width=in_size),
        out_shape=jax.ShapeDtypeStruct((bp, in_size), jnp.float32),
        grid=(bp // tb,),
        in_specs=[
            # activations stream per batch tile
            pl.BlockSpec((tb, pad), lambda i: (i, 0)),
            # weights / biases: constant block index -> resident in VMEM across steps
            pl.BlockSpec((n_layers, pad, pad), lambda i: (0, 0, 0)),
            pl.BlockSpec((n_layers, 1, pad), lambda i: (0, 0, 0)),
        ],
        # Output block's last dim equals the full (unpadded) array dim -> no wrapper
        # feature-slice copy; only trailing padded rows (if any) are dropped below.
        out_specs=pl.BlockSpec((tb, in_size), lambda i: (i, 0)),
        compiler_params=pltpu.CompilerParams(
            dimension_semantics=("parallel",),
            vmem_limit_bytes=vmem_limit,
        ),
    )(xp, w_stack, b_stack)

    return out if bp == batch else out[:batch]


def autoencoder_reference(params, x, *, bf16_matmul=False):
    """Plain-JAX reference (unpadded, per-layer).

    bf16_matmul=True replays the kernel's exact numerics (bf16 MXU operands,
    f32 accumulation / bias / ReLU) for a tight correctness check.
    """
    h = x
    for i, (w, b) in enumerate(params["layers"]):
        if bf16_matmul:
            h = jnp.dot(h.astype(jnp.bfloat16), w.astype(jnp.bfloat16),
                        preferred_element_type=jnp.float32) + b
        else:
            h = h @ w + b
        if params["relu_flags"][i]:
            h = jnp.maximum(h, 0.0)
    return h


if __name__ == "__main__":
    in_size = 120       # divisible by 2..6 -> layer widths 120,60,40,30,24,20
    latent_size = 8
    batch = 8

    key = jax.random.PRNGKey(0)
    kparams, kx = jax.random.split(key)
    params = make_autoencoder_params(in_size, latent_size, kparams)
    x = jax.random.normal(kx, (batch, in_size), dtype=jnp.float32)

    out = jax.block_until_ready(autoencoder_forward(params, x))
    assert out.shape == (batch, in_size), out.shape

    # Tight check against a reference that uses the same bf16-operand math.
    ref_bf16 = autoencoder_reference(params, x, bf16_matmul=True)
    assert jnp.allclose(out, ref_bf16, atol=1e-4, rtol=1e-3), (
        "Pallas output mismatch vs bf16-operand reference")

    # Loose check against the pure-f32 PyTorch-equivalent reference (bf16 operand
    # rounding is a deliberate, reviewed perf/accuracy trade).
    ref_f32 = autoencoder_reference(params, x, bf16_matmul=False)
    assert jnp.allclose(out, ref_f32, atol=1e-1, rtol=1e-1), (
        "Pallas output drifted too far from f32 reference")

    print("KERNEL_OK")
</pallas_src>

<mosaic_0001>
module attributes {stable_mosaic.version = 11 : i64} {
  func.func @_fused_autoencoder_kernel(%arg0: i32, %arg1: memref<8x128xf32, #tpu.memory_space<vmem>>, %arg2: memref<12x128x128xbf16, #tpu.memory_space<vmem>>, %arg3: memref<12x1x128xf32, #tpu.memory_space<vmem>>, %arg4: memref<8x120xf32, #tpu.memory_space<vmem>>) attributes {dimension_semantics = [#tpu.dimension_semantics<parallel>], iteration_bounds = array<i64: 1>, scalar_prefetch = 0 : i64, scratch_operands = 0 : i64, tpu.core_type = #tpu.core_type<tc>, window_params = [{transform_indices = @transform_0, window_bounds = array<i64: 8, 128>}, {pipeline_mode = #tpu.pipeline_mode<synchronous>, transform_indices = @transform_1, window_bounds = array<i64: 12, 128, 128>}, {pipeline_mode = #tpu.pipeline_mode<synchronous>, transform_indices = @transform_2, window_bounds = array<i64: 12, 1, 128>}, {transform_indices = @transform_3, window_bounds = array<i64: 8, 120>}]} {
    %c0 = arith.constant 0 : index
    %c0_0 = arith.constant 0 : index
    %0 = vector.load %arg1[%c0, %c0_0] : memref<8x128xf32, #tpu.memory_space<vmem>>, vector<8x128xf32>
    %1 = arith.truncf %0 : vector<8x128xf32> to vector<8x128xbf16>
    %c0_1 = arith.constant 0 : index
    %c0_2 = arith.constant 0 : index
    %c0_3 = arith.constant 0 : index
    %2 = vector.load %arg2[%c0_1, %c0_2, %c0_3] : memref<12x128x128xbf16, #tpu.memory_space<vmem>>, vector<1x128x128xbf16>
    %3 = vector.shape_cast %2 : vector<1x128x128xbf16> to vector<128x128xbf16>
    %cst = arith.constant dense<0.000000e+00> : vector<8x128xf32>
    %4 = tpu.matmul %1, %3, %cst {dimension_numbers = #tpu.dot_dimension_numbers<[1], [0], [0], [1], [0, 0, 1, 1], [], []>} : vector<8x128xbf16>, vector<128x128xbf16>, vector<8x128xf32> -> vector<8x128xf32>
    %c0_4 = arith.constant 0 : index
    %c0_5 = arith.constant 0 : index
    %c0_6 = arith.constant 0 : index
    %5 = vector.load %arg3[%c0_4, %c0_5, %c0_6] : memref<12x1x128xf32, #tpu.memory_space<vmem>>, vector<1x1x128xf32>
    %6 = vector.shape_cast %5 : vector<1x1x128xf32> to vector<1x128xf32>
    %7 = vector.broadcast %6 : vector<1x128xf32> to vector<8x128xf32>
    %8 = arith.addf %4, %7 : vector<8x128xf32>
    %cst_7 = arith.constant 0.000000e+00 : f32
    %9 = vector.broadcast %cst_7 : f32 to vector<8x128xf32>
    %10 = arith.maximumf %8, %9 : vector<8x128xf32>
    %11 = arith.truncf %10 : vector<8x128xf32> to vector<8x128xbf16>
    %c1 = arith.constant 1 : index
    %c0_8 = arith.constant 0 : index
    %c0_9 = arith.constant 0 : index
    %12 = vector.load %arg2[%c1, %c0_8, %c0_9] : memref<12x128x128xbf16, #tpu.memory_space<vmem>>, vector<1x128x128xbf16>
    %13 = vector.shape_cast %12 : vector<1x128x128xbf16> to vector<128x128xbf16>
    %cst_10 = arith.constant dense<0.000000e+00> : vector<8x128xf32>
    %14 = tpu.matmul %11, %13, %cst_10 {dimension_numbers = #tpu.dot_dimension_numbers<[1], [0], [0], [1], [0, 0, 1, 1], [], []>} : vector<8x128xbf16>, vector<128x128xbf16>, vector<8x128xf32> -> vector<8x128xf32>
    %c1_11 = arith.constant 1 : index
    %c0_12 = arith.constant 0 : index
    %c0_13 = arith.constant 0 : index
    %15 = vector.load %arg3[%c1_11, %c0_12, %c0_13] : memref<12x1x128xf32, #tpu.memory_space<vmem>>, vector<1x1x128xf32>
    %16 = vector.shape_cast %15 : vector<1x1x128xf32> to vector<1x128xf32>
    %17 = vector.broadcast %16 : vector<1x128xf32> to vector<8x128xf32>
    %18 = arith.addf %14, %17 : vector<8x128xf32>
    %cst_14 = arith.constant 0.000000e+00 : f32
    %19 = vector.broadcast %cst_14 : f32 to vector<8x128xf32>
    %20 = arith.maximumf %18, %19 : vector<8x128xf32>
    %21 = arith.truncf %20 : vector<8x128xf32> to vector<8x128xbf16>
    %c2 = arith.constant 2 : index
    %c0_15 = arith.constant 0 : index
    %c0_16 = arith.constant 0 : index
    %22 = vector.load %arg2[%c2, %c0_15, %c0_16] : memref<12x128x128xbf16, #tpu.memory_space<vmem>>, vector<1x128x128xbf16>
    %23 = vector.shape_cast %22 : vector<1x128x128xbf16> to vector<128x128xbf16>
    %cst_17 = arith.constant dense<0.000000e+00> : vector<8x128xf32>
    %24 = tpu.matmul %21, %23, %cst_17 {dimension_numbers = #tpu.dot_dimension_numbers<[1], [0], [0], [1], [0, 0, 1, 1], [], []>} : vector<8x128xbf16>, vector<128x128xbf16>, vector<8x128xf32> -> vector<8x128xf32>
    %c2_18 = arith.constant 2 : index
    %c0_19 = arith.constant 0 : index
    %c0_20 = arith.constant 0 : index
    %25 = vector.load %arg3[%c2_18, %c0_19, %c0_20] : memref<12x1x128xf32, #tpu.memory_space<vmem>>, vector<1x1x128xf32>
    %26 = vector.shape_cast %25 : vector<1x1x128xf32> to vector<1x128xf32>
    %27 = vector.broadcast %26 : vector<1x128xf32> to vector<8x128xf32>
    %28 = arith.addf %24, %27 : vector<8x128xf32>
    %cst_21 = arith.constant 0.000000e+00 : f32
    %29 = vector.broadcast %cst_21 : f32 to vector<8x128xf32>
    %30 = arith.maximumf %28, %29 : vector<8x128xf32>
    %31 = arith.truncf %30 : vector<8x128xf32> to vector<8x128xbf16>
    %c3 = arith.constant 3 : index
    %c0_22 = arith.constant 0 : index
    %c0_23 = arith.constant 0 : index
    %32 = vector.load %arg2[%c3, %c0_22, %c0_23] : memref<12x128x128xbf16, #tpu.memory_space<vmem>>, vector<1x128x128xbf16>
    %33 = vector.shape_cast %32 : vector<1x128x128xbf16> to vector<128x128xbf16>
    %cst_24 = arith.constant dense<0.000000e+00> : vector<8x128xf32>
    %34 = tpu.matmul %31, %33, %cst_24 {dimension_numbers = #tpu.dot_dimension_numbers<[1], [0], [0], [1], [0, 0, 1, 1], [], []>} : vector<8x128xbf16>, vector<128x128xbf16>, vector<8x128xf32> -> vector<8x128xf32>
    %c3_25 = arith.constant 3 : index
    %c0_26 = arith.constant 0 : index
    %c0_27 = arith.constant 0 : index
    %35 = vector.load %arg3[%c3_25, %c0_26, %c0_27] : memref<12x1x128xf32, #tpu.memory_space<vmem>>, vector<1x1x128xf32>
    %36 = vector.shape_cast %35 : vector<1x1x128xf32> to vector<1x128xf32>
    %37 = vector.broadcast %36 : vector<1x128xf32> to vector<8x128xf32>
    %38 = arith.addf %34, %37 : vector<8x128xf32>
    %cst_28 = arith.constant 0.000000e+00 : f32
    %39 = vector.broadcast %cst_28 : f32 to vector<8x128xf32>
    %40 = arith.maximumf %38, %39 : vector<8x128xf32>
    %41 = arith.truncf %40 : vector<8x128xf32> to vector<8x128xbf16>
    %c4 = arith.constant 4 : index
    %c0_29 = arith.constant 0 : index
    %c0_30 = arith.constant 0 : index
    %42 = vector.load %arg2[%c4, %c0_29, %c0_30] : memref<12x128x128xbf16, #tpu.memory_space<vmem>>, vector<1x128x128xbf16>
    %43 = vector.shape_cast %42 : vector<1x128x128xbf16> to vector<128x128xbf16>
    %cst_31 = arith.constant dense<0.000000e+00> : vector<8x128xf32>
    %44 = tpu.matmul %41, %43, %cst_31 {dimension_numbers = #tpu.dot_dimension_numbers<[1], [0], [0], [1], [0, 0, 1, 1], [], []>} : vector<8x128xbf16>, vector<128x128xbf16>, vector<8x128xf32> -> vector<8x128xf32>
    %c4_32 = arith.constant 4 : index
    %c0_33 = arith.constant 0 : index
    %c0_34 = arith.constant 0 : index
    %45 = vector.load %arg3[%c4_32, %c0_33, %c0_34] : memref<12x1x128xf32, #tpu.memory_space<vmem>>, vector<1x1x128xf32>
    %46 = vector.shape_cast %45 : vector<1x1x128xf32> to vector<1x128xf32>
    %47 = vector.broadcast %46 : vector<1x128xf32> to vector<8x128xf32>
    %48 = arith.addf %44, %47 : vector<8x128xf32>
    %cst_35 = arith.constant 0.000000e+00 : f32
    %49 = vector.broadcast %cst_35 : f32 to vector<8x128xf32>
    %50 = arith.maximumf %48, %49 : vector<8x128xf32>
    %51 = arith.truncf %50 : vector<8x128xf32> to vector<8x128xbf16>
    %c5 = arith.constant 5 : index
    %c0_36 = arith.constant 0 : index
    %c0_37 = arith.constant 0 : index
    %52 = vector.load %arg2[%c5, %c0_36, %c0_37] : memref<12x128x128xbf16, #tpu.memory_space<vmem>>, vector<1x128x128xbf16>
    %53 = vector.shape_cast %52 : vector<1x128x128xbf16> to vector<128x128xbf16>
    %cst_38 = arith.constant dense<0.000000e+00> : vector<8x128xf32>
    %54 = tpu.matmul %51, %53, %cst_38 {dimension_numbers = #tpu.dot_dimension_numbers<[1], [0], [0], [1], [0, 0, 1, 1], [], []>} : vector<8x128xbf16>, vector<128x128xbf16>, vector<8x128xf32> -> vector<8x128xf32>
    %c5_39 = arith.constant 5 : index
    %c0_40 = arith.constant 0 : index
    %c0_41 = arith.constant 0 : index
    %55 = vector.load %arg3[%c5_39, %c0_40, %c0_41] : memref<12x1x128xf32, #tpu.memory_space<vmem>>, vector<1x1x128xf32>
    %56 = vector.shape_cast %55 : vector<1x1x128xf32> to vector<1x128xf32>
    %57 = vector.broadcast %56 : vector<1x128xf32> to vector<8x128xf32>
    %58 = arith.addf %54, %57 : vector<8x128xf32>
    %59 = arith.truncf %58 : vector<8x128xf32> to vector<8x128xbf16>
    %c6 = arith.constant 6 : index
    %c0_42 = arith.constant 0 : index
    %c0_43 = arith.constant 0 : index
    %60 = vector.load %arg2[%c6, %c0_42, %c0_43] : memref<12x128x128xbf16, #tpu.memory_space<vmem>>, vector<1x128x128xbf16>
    %61 = vector.shape_cast %60 : vector<1x128x128xbf16> to vector<128x128xbf16>
    %cst_44 = arith.constant dense<0.000000e+00> : vector<8x128xf32>
    %62 = tpu.matmul %59, %61, %cst_44 {dimension_numbers = #tpu.dot_dimension_numbers<[1], [0], [0], [1], [0, 0, 1, 1], [], []>} : vector<8x128xbf16>, vector<128x128xbf16>, vector<8x128xf32> -> vector<8x128xf32>
    %c6_45 = arith.constant 6 : index
    %c0_46 = arith.constant 0 : index
    %c0_47 = arith.constant 0 : index
    %63 = vector.load %arg3[%c6_45, %c0_46, %c0_47] : memref<12x1x128xf32, #tpu.memory_space<vmem>>, vector<1x1x128xf32>
    %64 = vector.shape_cast %63 : vector<1x1x128xf32> to vector<1x128xf32>
    %65 = vector.broadcast %64 : vector<1x128xf32> to vector<8x128xf32>
    %66 = arith.addf %62, %65 : vector<8x128xf32>
    %cst_48 = arith.constant 0.000000e+00 : f32
    %67 = vector.broadcast %cst_48 : f32 to vector<8x128xf32>
    %68 = arith.maximumf %66, %67 : vector<8x128xf32>
    %69 = arith.truncf %68 : vector<8x128xf32> to vector<8x128xbf16>
    %c7 = arith.constant 7 : index
    %c0_49 = arith.constant 0 : index
    %c0_50 = arith.constant 0 : index
    %70 = vector.load %arg2[%c7, %c0_49, %c0_50] : memref<12x128x128xbf16, #tpu.memory_space<vmem>>, vector<1x128x128xbf16>
    %71 = vector.shape_cast %70 : vector<1x128x128xbf16> to vector<128x128xbf16>
    %cst_51 = arith.constant dense<0.000000e+00> : vector<8x128xf32>
    %72 = tpu.matmul %69, %71, %cst_51 {dimension_numbers = #tpu.dot_dimension_numbers<[1], [0], [0], [1], [0, 0, 1, 1], [], []>} : vector<8x128xbf16>, vector<128x128xbf16>, vector<8x128xf32> -> vector<8x128xf32>
    %c7_52 = arith.constant 7 : index
    %c0_53 = arith.constant 0 : index
    %c0_54 = arith.constant 0 : index
    %73 = vector.load %arg3[%c7_52, %c0_53, %c0_54] : memref<12x1x128xf32, #tpu.memory_space<vmem>>, vector<1x1x128xf32>
    %74 = vector.shape_cast %73 : vector<1x1x128xf32> to vector<1x128xf32>
    %75 = vector.broadcast %74 : vector<1x128xf32> to vector<8x128xf32>
    %76 = arith.addf %72, %75 : vector<8x128xf32>
    %cst_55 = arith.constant 0.000000e+00 : f32
    %77 = vector.broadcast %cst_55 : f32 to vector<8x128xf32>
    %78 = arith.maximumf %76, %77 : vector<8x128xf32>
    %79 = arith.truncf %78 : vector<8x128xf32> to vector<8x128xbf16>
    %c8 = arith.constant 8 : index
    %c0_56 = arith.constant 0 : index
    %c0_57 = arith.constant 0 : index
    %80 = vector.load %arg2[%c8, %c0_56, %c0_57] : memref<12x128x128xbf16, #tpu.memory_space<vmem>>, vector<1x128x128xbf16>
    %81 = vector.shape_cast %80 : vector<1x128x128xbf16> to vector<128x128xbf16>
    %cst_58 = arith.constant dense<0.000000e+00> : vector<8x128xf32>
    %82 = tpu.matmul %79, %81, %cst_58 {dimension_numbers = #tpu.dot_dimension_numbers<[1], [0], [0], [1], [0, 0, 1, 1], [], []>} : vector<8x128xbf16>, vector<128x128xbf16>, vector<8x128xf32> -> vector<8x128xf32>
    %c8_59 = arith.constant 8 : index
    %c0_60 = arith.constant 0 : index
    %c0_61 = arith.constant 0 : index
    %83 = vector.load %arg3[%c8_59, %c0_60, %c0_61] : memref<12x1x128xf32, #tpu.memory_space<vmem>>, vector<1x1x128xf32>
    %84 = vector.shape_cast %83 : vector<1x1x128xf32> to vector<1x128xf32>
    %85 = vector.broadcast %84 : vector<1x128xf32> to vector<8x128xf32>
    %86 = arith.addf %82, %85 : vector<8x128xf32>
    %cst_62 = arith.constant 0.000000e+00 : f32
    %87 = vector.broadcast %cst_62 : f32 to vector<8x128xf32>
    %88 = arith.maximumf %86, %87 : vector<8x128xf32>
    %89 = arith.truncf %88 : vector<8x128xf32> to vector<8x128xbf16>
    %c9 = arith.constant 9 : index
    %c0_63 = arith.constant 0 : index
    %c0_64 = arith.constant 0 : index
    %90 = vector.load %arg2[%c9, %c0_63, %c0_64] : memref<12x128x128xbf16, #tpu.memory_space<vmem>>, vector<1x128x128xbf16>
    %91 = vector.shape_cast %90 : vector<1x128x128xbf16> to vector<128x128xbf16>
    %cst_65 = arith.constant dense<0.000000e+00> : vector<8x128xf32>
    %92 = tpu.matmul %89, %91, %cst_65 {dimension_numbers = #tpu.dot_dimension_numbers<[1], [0], [0], [1], [0, 0, 1, 1], [], []>} : vector<8x128xbf16>, vector<128x128xbf16>, vector<8x128xf32> -> vector<8x128xf32>
    %c9_66 = arith.constant 9 : index
    %c0_67 = arith.constant 0 : index
    %c0_68 = arith.constant 0 : index
    %93 = vector.load %arg3[%c9_66, %c0_67, %c0_68] : memref<12x1x128xf32, #tpu.memory_space<vmem>>, vector<1x1x128xf32>
    %94 = vector.shape_cast %93 : vector<1x1x128xf32> to vector<1x128xf32>
    %95 = vector.broadcast %94 : vector<1x128xf32> to vector<8x128xf32>
    %96 = arith.addf %92, %95 : vector<8x128xf32>
    %cst_69 = arith.constant 0.000000e+00 : f32
    %97 = vector.broadcast %cst_69 : f32 to vector<8x128xf32>
    %98 = arith.maximumf %96, %97 : vector<8x128xf32>
    %99 = arith.truncf %98 : vector<8x128xf32> to vector<8x128xbf16>
    %c10 = arith.constant 10 : index
    %c0_70 = arith.constant 0 : index
    %c0_71 = arith.constant 0 : index
    %100 = vector.load %arg2[%c10, %c0_70, %c0_71] : memref<12x128x128xbf16, #tpu.memory_space<vmem>>, vector<1x128x128xbf16>
    %101 = vector.shape_cast %100 : vector<1x128x128xbf16> to vector<128x128xbf16>
    %cst_72 = arith.constant dense<0.000000e+00> : vector<8x128xf32>
    %102 = tpu.matmul %99, %101, %cst_72 {dimension_numbers = #tpu.dot_dimension_numbers<[1], [0], [0], [1], [0, 0, 1, 1], [], []>} : vector<8x128xbf16>, vector<128x128xbf16>, vector<8x128xf32> -> vector<8x128xf32>
    %c10_73 = arith.constant 10 : index
    %c0_74 = arith.constant 0 : index
    %c0_75 = arith.constant 0 : index
    %103 = vector.load %arg3[%c10_73, %c0_74, %c0_75] : memref<12x1x128xf32, #tpu.memory_space<vmem>>, vector<1x1x128xf32>
    %104 = vector.shape_cast %103 : vector<1x1x128xf32> to vector<1x128xf32>
    %105 = vector.broadcast %104 : vector<1x128xf32> to vector<8x128xf32>
    %106 = arith.addf %102, %105 : vector<8x128xf32>
    %cst_76 = arith.constant 0.000000e+00 : f32
    %107 = vector.broadcast %cst_76 : f32 to vector<8x128xf32>
    %108 = arith.maximumf %106, %107 : vector<8x128xf32>
    %109 = arith.truncf %108 : vector<8x128xf32> to vector<8x128xbf16>
    %c11 = arith.constant 11 : index
    %c0_77 = arith.constant 0 : index
    %c0_78 = arith.constant 0 : index
    %110 = vector.load %arg2[%c11, %c0_77, %c0_78] : memref<12x128x128xbf16, #tpu.memory_space<vmem>>, vector<1x128x128xbf16>
    %111 = vector.shape_cast %110 : vector<1x128x128xbf16> to vector<128x128xbf16>
    %cst_79 = arith.constant dense<0.000000e+00> : vector<8x128xf32>
    %112 = tpu.matmul %109, %111, %cst_79 {dimension_numbers = #tpu.dot_dimension_numbers<[1], [0], [0], [1], [0, 0, 1, 1], [], []>} : vector<8x128xbf16>, vector<128x128xbf16>, vector<8x128xf32> -> vector<8x128xf32>
    %c11_80 = arith.constant 11 : index
    %c0_81 = arith.constant 0 : index
    %c0_82 = arith.constant 0 : index
    %113 = vector.load %arg3[%c11_80, %c0_81, %c0_82] : memref<12x1x128xf32, #tpu.memory_space<vmem>>, vector<1x1x128xf32>
    %114 = vector.shape_cast %113 : vector<1x1x128xf32> to vector<1x128xf32>
    %115 = vector.broadcast %114 : vector<1x128xf32> to vector<8x128xf32>
    %116 = arith.addf %112, %115 : vector<8x128xf32>
    %117 = vector.extract_strided_slice %116 {offsets = [0, 0], sizes = [8, 120], strides = [1, 1]} : vector<8x128xf32> to vector<8x120xf32>
    %c0_83 = arith.constant 0 : index
    %c0_84 = arith.constant 0 : index
    %118 = vector.load %arg4[%c0_83, %c0_84] : memref<8x120xf32, #tpu.memory_space<vmem>>, vector<8x120xf32>
    tpu.vector_store %arg4[%c0_83, %c0_84], %117 {strides = array<i32>} : memref<8x120xf32, #tpu.memory_space<vmem>>, vector<8x120xf32>,
    return
  }
  func.func @transform_0(%arg0: i32) -> (i32, i32) {
    %c0_i32 = arith.constant 0 : i32
    %c0_i32_0 = arith.constant 0 : i32
    return %arg0, %c0_i32 : i32, i32
  }
  func.func @transform_1(%arg0: i32) -> (i32, i32, i32) {
    %c0_i32 = arith.constant 0 : i32
    %c0_i32_0 = arith.constant 0 : i32
    %c0_i32_1 = arith.constant 0 : i32
    %c0_i32_2 = arith.constant 0 : i32
    return %c0_i32, %c0_i32_0, %c0_i32_1 : i32, i32, i32
  }
  func.func @transform_2(%arg0: i32) -> (i32, i32, i32) {
    %c0_i32 = arith.constant 0 : i32
    %c0_i32_0 = arith.constant 0 : i32
    %c0_i32_1 = arith.constant 0 : i32
    %c0_i32_2 = arith.constant 0 : i32
    return %c0_i32, %c0_i32_0, %c0_i32_1 : i32, i32, i32
  }
  func.func @transform_3(%arg0: i32) -> (i32, i32) {
    %c0_i32 = arith.constant 0 : i32
    %c0_i32_0 = arith.constant 0 : i32
    return %arg0, %c0_i32 : i32, i32
  }
}

</mosaic_0001>

<llo_original>
// kernel: tpu_custom_call.1
$region0: #{tpu_custom_call.1}
  #allocation0 [shape = 'u32[]', space=smem, size = 0x4, offset = 0x4, fixed_abs, tag = 'smem constant byte address 0x4 - core index']
  #allocation1 [shape = 'u32[144,128]{1,0:T(1,128)}', space=vmem, size = 0x12000, scoped, tag = 'internal scratch']
  %s0 = inlined_call_operand.hbm [shape: f32[8,128], index: 0, kind: input, shape index: {}]
  %s1 = inlined_call_operand.hbm [shape: bf16[12,128,128], index: 1, kind: input, shape index: {}]
  %s2 = inlined_call_operand.hbm [shape: f32[12,1,128], index: 2, kind: input, shape index: {}]
  %s3 = inlined_call_operand.hbm [shape: f32[8,120], index: 3, kind: output, shape index: {}]
  %s4 = sld [smem:[#allocation0]]
  $region34: #{tpu_custom_call.1} parent=0
    _
  %s6 = ssub.s32 1, %s4
  %s7 = scalar_select 0, %s6, %s4
  $region1: #{tpu_custom_call.1} parent=0
    #allocation2 [shape = 'u8[4096]{0}', space=vmem, size = 0x1000, scoped, tag = 'input window, operand 0, single buffered']
    #allocation3 [shape = 's32[1]{0}', space=sflag, size = 0x4, scoped, tag = 'scoped memory for tpu_custom_call.1']
    #allocation4 [shape = 's32[1]{0}', space=sflag, size = 0x4, scoped, tag = 'scoped memory for tpu_custom_call.1']
    #allocation5 [shape = 'u8[393216]{0}', space=vmem, size = 0x60000, scoped, tag = 'input window, operand 1, single buffered']
    #allocation6 [shape = 's32[1]{0}', space=sflag, size = 0x4, scoped, tag = 'scoped memory for tpu_custom_call.1']
    #allocation7 [shape = 'u8[6144]{0}', space=vmem, size = 0x1800, scoped, tag = 'input window, operand 2, single buffered']
    #allocation8 [shape = 'u8[4096]{0}', space=vmem, size = 0x1000, scoped, tag = 'output window, operand 0, single buffered']
    %8 = vsyncpa [#allocation3], 0
    %9 = vsyncpa [#allocation6], 0
    %10 = vsyncpa [#allocation4], 0
    // Predicated region
    $region2: #{tpu_custom_call.1} parent=1 // pred_check
      _
    $region3: #{tpu_custom_call.1} parent=1 // pred_check_branch
      %12 = sbr.rel (0) target = $region5
    $region4: #{tpu_custom_call.1} parent=1 // pred_region
      %s14 = ssub.s32 128, 128
      %15 = vsyncadd [#allocation3], %s14
      %s17 = sshll.u32 [#allocation2], 4
      %s18 = int_to_ptr.vmem [resolvable:$true] %s17
      %20 = dma.hbm_to_vmem [thread:$0]  %s0, 128, %s18, [#allocation3]
    $region5: #{tpu_custom_call.1} parent=1 // pred_fallthru
      _
    // Predicated region
    $region6: #{tpu_custom_call.1} parent=1 // pred_check
      _
    $region7: #{tpu_custom_call.1} parent=1 // pred_check_branch
      %22 = sbr.rel (0) target = $region9
    $region8: #{tpu_custom_call.1} parent=1 // pred_region
      %s24 = ssub.s32 12288, 12288
      %25 = vsyncadd [#allocation6], %s24
      %s26 = sshll.u32 [#allocation5], 4
      %s27 = int_to_ptr.vmem [resolvable:$true] %s26
      %32 = dma.hbm_to_vmem [thread:$0]  %s1, 12288, %s27, [#allocation6], 64, 64, 4
    $region9: #{tpu_custom_call.1} parent=1 // pred_fallthru
      _
    // Predicated region
    $region10: #{tpu_custom_call.1} parent=1 // pred_check
      _
    $region11: #{tpu_custom_call.1} parent=1 // pred_check_branch
      %34 = sbr.rel (0) target = $region13
    $region12: #{tpu_custom_call.1} parent=1 // pred_region
      %s36 = ssub.s32 192, 192
      %37 = vsyncadd [#allocation6], %s36
      %s38 = sshll.u32 [#allocation7], 4
      %s39 = int_to_ptr.vmem [resolvable:$true] %s38
      %44 = dma.hbm_to_vmem [thread:$0]  %s2, 192, %s39, [#allocation6], 16, 16, 1
    $region13: #{tpu_custom_call.1} parent=1 // pred_fallthru
      _
    // Predicated region
    $region14: #{tpu_custom_call.1} parent=1 // pred_check
      _
    $region15: #{tpu_custom_call.1} parent=1 // pred_check_branch
      %46 = sbr.rel (0) target = $region17
    $region16: #{tpu_custom_call.1} parent=1 // pred_region
      %47 = dma.done [#allocation3], 128
    $region17: #{tpu_custom_call.1} parent=1 // pred_fallthru
      _
    // Predicated region
    $region18: #{tpu_custom_call.1} parent=1 // pred_check
      _
    $region19: #{tpu_custom_call.1} parent=1 // pred_check_branch
      %49 = sbr.rel (0) target = $region21
    $region20: #{tpu_custom_call.1} parent=1 // pred_region
      %50 = dma.done [#allocation6], 12288
    $region21: #{tpu_custom_call.1} parent=1 // pred_fallthru
      _
    // Predicated region
    $region22: #{tpu_custom_call.1} parent=1 // pred_check
      _
    $region23: #{tpu_custom_call.1} parent=1 // pred_check_branch
      %52 = sbr.rel (0) target = $region25
    $region24: #{tpu_custom_call.1} parent=1 // pred_region
      %53 = dma.done [#allocation6], 192
    $region25: #{tpu_custom_call.1} parent=1 // pred_fallthru
      _
    %v55 = vld [vmem:[#allocation2] sm:$0xff]
    %v56 = vpack.c.bf16 %v55, %v55
    %v57 = vld [vmem:[#allocation5] sm:$0xf]
    %v58 = vld [vmem:[#allocation5 + $0x4] sm:$0xf]
    %v59 = vld [vmem:[#allocation5 + $0x8] sm:$0xf]
    %v60 = vld [vmem:[#allocation5 + $0xc] sm:$0xf]
    %v61 = vld [vmem:[#allocation5 + $0x10] sm:$0xf]
    %v62 = vld [vmem:[#allocation5 + $0x14] sm:$0xf]
    %v63 = vld [vmem:[#allocation5 + $0x18] sm:$0xf]
    %v64 = vld [vmem:[#allocation5 + $0x1c] sm:$0xf]
    %v65 = vld [vmem:[#allocation5 + $0x20] sm:$0xf]
    %v66 = vld [vmem:[#allocation5 + $0x24] sm:$0xf]
    %v67 = vld [vmem:[#allocation5 + $0x28] sm:$0xf]
    %v68 = vld [vmem:[#allocation5 + $0x2c] sm:$0xf]
    %v69 = vld [vmem:[#allocation5 + $0x30] sm:$0xf]
    %v70 = vld [vmem:[#allocation5 + $0x34] sm:$0xf]
    %v71 = vld [vmem:[#allocation5 + $0x38] sm:$0xf]
    %v72 = vld [vmem:[#allocation5 + $0x3c] sm:$0xf]
    %v73 = vld [vmem:[#allocation7] sm:$0x1]
    %v75 = vlaneseq
    %v76 = vshrl.u32 %v75, 7
    %v77 = vsub.s32 0, %v76
    %v78 = vrot.slane %v73, %v77
    %v96 = vunpack.c.l.b16 %v57
    %v97 = vunpack.c.l.b16 %v58
    %v98 = vunpack.c.l.b16 %v59
    %v99 = vunpack.c.l.b16 %v60
    %v100 = vunpack.c.l.b16 %v61
    %v101 = vunpack.c.l.b16 %v62
    %v102 = vunpack.c.l.b16 %v63
    %v103 = vunpack.c.l.b16 %v64
    %v104 = vunpack.c.l.b16 %v65
    %v105 = vunpack.c.l.b16 %v66
    %v106 = vunpack.c.l.b16 %v67
    %v107 = vunpack.c.l.b16 %v68
    %v108 = vunpack.c.l.b16 %v69
    %v109 = vunpack.c.l.b16 %v70
    %v110 = vunpack.c.l.b16 %v71
    %v111 = vunpack.c.l.b16 %v72
    %v112 = vpack.c.b16 %v97, %v96
    %v113 = vpack.c.b16 %v99, %v98
    %v114 = vpack.c.b16 %v101, %v100
    %v115 = vpack.c.b16 %v103, %v102
    %v116 = vpack.c.b16 %v105, %v104
    %v117 = vpack.c.b16 %v107, %v106
    %v118 = vpack.c.b16 %v109, %v108
    %v119 = vpack.c.b16 %v111, %v110
    %128 = vmatprep.subr.bf16.mxu0 0
    %129 = vmatpush1.bf16.msra.mxu0 %v119
    %130 = vmatprep.subr.bf16.mxu0 0
    %131 = vmatpush1.bf16.msra.mxu0 %v118
    %132 = vmatprep.subr.bf16.mxu0 0
    %133 = vmatpush1.bf16.msra.mxu0 %v117
    %134 = vmatprep.subr.bf16.mxu0 0
    %135 = vmatpush1.bf16.msra.mxu0 %v116
    %136 = vmatprep.subr.bf16.mxu0 0
    %137 = vmatpush1.bf16.msra.mxu0 %v115
    %138 = vmatprep.subr.bf16.mxu0 0
    %139 = vmatpush1.bf16.msra.mxu0 %v114
    %140 = vmatprep.subr.bf16.mxu0 0
    %141 = vmatpush1.bf16.msra.mxu0 %v113
    %142 = vmatprep.subr.bf16.mxu0 0
    %143 = vmatpush1.bf16.msra.mxu0 %v112
    %144 = vmatprep.subr.bf16.mxu0 0
    %145 = vmatpush2.bf16.msra.mxu0 0
    %146 = vmatprep.subr.bf16.mxu0 0
    %147 = vmatpush2.bf16.msra.mxu0 0
    %148 = vmatprep.subr.bf16.mxu0 0
    %149 = vmatpush2.bf16.msra.mxu0 0
    %150 = vmatprep.subr.bf16.mxu0 0
    %151 = vmatpush2.bf16.msra.mxu0 0
    %152 = vmatprep.subr.bf16.mxu0 0
    %153 = vmatpush2.bf16.msra.mxu0 0
    %154 = vmatprep.subr.bf16.mxu0 0
    %155 = vmatpush2.bf16.msra.mxu0 0
    %156 = vmatprep.subr.bf16.mxu0 0
    %157 = vmatpush2.bf16.msra.mxu0 0
    %158 = vmatprep.subr.bf16.mxu0 0
    %159 = vmatpush2.bf16.msra.mxu0 0
    %160 = vmatprep.mubr.bf16.mxu0 0
    %161 = vmatmul.mubr.bf16.gmra.mxu0 %v56
    %v162 = vpop.f32.mrf.mxu0
    %v163 = vadd.f32 %v78, %v162
    %v164 = vpop.f32.mrf.mxu0
    %v165 = vpop.f32.mrf.mxu0
    %v166 = vpop.f32.mrf.mxu0
    %167 = vdwg.mxu0
    %v168 = vmax.f32 %v163, 0.0
    %v169 = vpack.c.bf16 %v168, %v168
    %s170 = scalar_lea.vmem [#allocation5], 64
    %v171 = vld [vmem:[%s170] sm:$0xf]
    %v172 = vld [vmem:[%s170 + $0x4] sm:$0xf]
    %v173 = vld [vmem:[%s170 + $0x8] sm:$0xf]
    %v174 = vld [vmem:[%s170 + $0xc] sm:$0xf]
    %v175 = vld [vmem:[%s170 + $0x10] sm:$0xf]
    %v176 = vld [vmem:[%s170 + $0x14] sm:$0xf]
    %v177 = vld [vmem:[%s170 + $0x18] sm:$0xf]
    %v178 = vld [vmem:[%s170 + $0x1c] sm:$0xf]
    %v179 = vld [vmem:[%s170 + $0x20] sm:$0xf]
    %v180 = vld [vmem:[%s170 + $0x24] sm:$0xf]
    %v181 = vld [vmem:[%s170 + $0x28] sm:$0xf]
    %v182 = vld [vmem:[%s170 + $0x2c] sm:$0xf]
    %v183 = vld [vmem:[%s170 + $0x30] sm:$0xf]
    %v184 = vld [vmem:[%s170 + $0x34] sm:$0xf]
    %v185 = vld [vmem:[%s170 + $0x38] sm:$0xf]
    %v186 = vld [vmem:[%s170 + $0x3c] sm:$0xf]
    %s187 = scalar_lea.vmem [#allocation7], 1
    %v188 = vld [vmem:[%s187] sm:$0x1]
    %v190 = vlaneseq
    %v191 = vshrl.u32 %v190, 7
    %v192 = vsub.s32 0, %v191
    %v193 = vrot.slane %v188, %v192
    %v211 = vunpack.c.l.b16 %v171
    %v212 = vunpack.c.l.b16 %v172
    %v213 = vunpack.c.l.b16 %v173
    %v214 = vunpack.c.l.b16 %v174
    %v215 = vunpack.c.l.b16 %v175
    %v216 = vunpack.c.l.b16 %v176
    %v217 = vunpack.c.l.b16 %v177
    %v218 = vunpack.c.l.b16 %v178
    %v219 = vunpack.c.l.b16 %v179
    %v220 = vunpack.c.l.b16 %v180
    %v221 = vunpack.c.l.b16 %v181
    %v222 = vunpack.c.l.b16 %v182
    %v223 = vunpack.c.l.b16 %v183
    %v224 = vunpack.c.l.b16 %v184
    %v225 = vunpack.c.l.b16 %v185
    %v226 = vunpack.c.l.b16 %v186
    %v227 = vpack.c.b16 %v212, %v211
    %v228 = vpack.c.b16 %v214, %v213
    %v229 = vpack.c.b16 %v216, %v215
    %v230 = vpack.c.b16 %v218, %v217
    %v231 = vpack.c.b16 %v220, %v219
    %v232 = vpack.c.b16 %v222, %v221
    %v233 = vpack.c.b16 %v224, %v223
    %v234 = vpack.c.b16 %v226, %v225
    %243 = vmatprep.subr.bf16.mxu0 0
    %244 = vmatpush1.bf16.msra.mxu0 %v234
    %245 = vmatprep.subr.bf16.mxu0 0
    %246 = vmatpush1.bf16.msra.mxu0 %v233
    %247 = vmatprep.subr.bf16.mxu0 0
    %248 = vmatpush1.bf16.msra.mxu0 %v232
    %249 = vmatprep.subr.bf16.mxu0 0
    %250 = vmatpush1.bf16.msra.mxu0 %v231
    %251 = vmatprep.subr.bf16.mxu0 0
    %252 = vmatpush1.bf16.msra.mxu0 %v230
    %253 = vmatprep.subr.bf16.mxu0 0
    %254 = vmatpush1.bf16.msra.mxu0 %v229
    %255 = vmatprep.subr.bf16.mxu0 0
    %256 = vmatpush1.bf16.msra.mxu0 %v228
    %257 = vmatprep.subr.bf16.mxu0 0
    %258 = vmatpush1.bf16.msra.mxu0 %v227
    %259 = vmatprep.subr.bf16.mxu0 0
    %260 = vmatpush2.bf16.msra.mxu0 0
    %261 = vmatprep.subr.bf16.mxu0 0
    %262 = vmatpush2.bf16.msra.mxu0 0
    %263 = vmatprep.subr.bf16.mxu0 0
    %264 = vmatpush2.bf16.msra.mxu0 0
    %265 = vmatprep.subr.bf16.mxu0 0
    %266 = vmatpush2.bf16.msra.mxu0 0
    %267 = vmatprep.subr.bf16.mxu0 0
    %268 = vmatpush2.bf16.msra.mxu0 0
    %269 = vmatprep.subr.bf16.mxu0 0
    %270 = vmatpush2.bf16.msra.mxu0 0
    %271 = vmatprep.subr.bf16.mxu0 0
    %272 = vmatpush2.bf16.msra.mxu0 0
    %273 = vmatprep.subr.bf16.mxu0 0
    %274 = vmatpush2.bf16.msra.mxu0 0
    %275 = vmatprep.mubr.bf16.mxu0 0
    %276 = vmatmul.mubr.bf16.gmra.mxu0 %v169
    %v277 = vpop.f32.mrf.mxu0
    %v278 = vadd.f32 %v193, %v277
    %v279 = vpop.f32.mrf.mxu0
    %v280 = vpop.f32.mrf.mxu0
    %v281 = vpop.f32.mrf.mxu0
    %282 = vdwg.mxu0
    %v283 = vmax.f32 %v278, 0.0
    %v284 = vpack.c.bf16 %v283, %v283
    %s285 = scalar_lea.vmem [#allocation5], 128
    %v286 = vld [vmem:[%s285] sm:$0xf]
    %v287 = vld [vmem:[%s285 + $0x4] sm:$0xf]
    %v288 = vld [vmem:[%s285 + $0x8] sm:$0xf]
    %v289 = vld [vmem:[%s285 + $0xc] sm:$0xf]
    %v290 = vld [vmem:[%s285 + $0x10] sm:$0xf]
    %v291 = vld [vmem:[%s285 + $0x14] sm:$0xf]
    %v292 = vld [vmem:[%s285 + $0x18] sm:$0xf]
    %v293 = vld [vmem:[%s285 + $0x1c] sm:$0xf]
    %v294 = vld [vmem:[%s285 + $0x20] sm:$0xf]
    %v295 = vld [vmem:[%s285 + $0x24] sm:$0xf]
    %v296 = vld [vmem:[%s285 + $0x28] sm:$0xf]
    %v297 = vld [vmem:[%s285 + $0x2c] sm:$0xf]
    %v298 = vld [vmem:[%s285 + $0x30] sm:$0xf]
    %v299 = vld [vmem:[%s285 + $0x34] sm:$0xf]
    %v300 = vld [vmem:[%s285 + $0x38] sm:$0xf]
    %v301 = vld [vmem:[%s285 + $0x3c] sm:$0xf]
    %s302 = scalar_lea.vmem [#allocation7], 2
    %v303 = vld [vmem:[%s302] sm:$0x1]
    %v305 = vlaneseq
    %v306 = vshrl.u32 %v305, 7
    %v307 = vsub.s32 0, %v306
    %v308 = vrot.slane %v303, %v307
    %v326 = vunpack.c.l.b16 %v286
    %v327 = vunpack.c.l.b16 %v287
    %v328 = vunpack.c.l.b16 %v288
    %v329 = vunpack.c.l.b16 %v289
    %v330 = vunpack.c.l.b16 %v290
    %v331 = vunpack.c.l.b16 %v291
    %v332 = vunpack.c.l.b16 %v292
    %v333 = vunpack.c.l.b16 %v293
    %v334 = vunpack.c.l.b16 %v294
    %v335 = vunpack.c.l.b16 %v295
    %v336 = vunpack.c.l.b16 %v296
    %v337 = vunpack.c.l.b16 %v297
    %v338 = vunpack.c.l.b16 %v298
    %v339 = vunpack.c.l.b16 %v299
    %v340 = vunpack.c.l.b16 %v300
    %v341 = vunpack.c.l.b16 %v301
    %v342 = vpack.c.b16 %v327, %v326
    %v343 = vpack.c.b16 %v329, %v328
    %v344 = vpack.c.b16 %v331, %v330
    %v345 = vpack.c.b16 %v333, %v332
    %v346 = vpack.c.b16 %v335, %v334
    %v347 = vpack.c.b16 %v337, %v336
    %v348 = vpack.c.b16 %v339, %v338
    %v349 = vpack.c.b16 %v341, %v340
    %358 = vmatprep.subr.bf16.mxu0 0
    %359 = vmatpush1.bf16.msra.mxu0 %v349
    %360 = vmatprep.subr.bf16.mxu0 0
    %361 = vmatpush1.bf16.msra.mxu0 %v348
    %362 = vmatprep.subr.bf16.mxu0 0
    %363 = vmatpush1.bf16.msra.mxu0 %v347
    %364 = vmatprep.subr.bf16.mxu0 0
    %365 = vmatpush1.bf16.msra.mxu0 %v346
    %366 = vmatprep.subr.bf16.mxu0 0
    %367 = vmatpush1.bf16.msra.mxu0 %v345
    %368 = vmatprep.subr.bf16.mxu0 0
    %369 = vmatpush1.bf16.msra.mxu0 %v344
    %370 = vmatprep.subr.bf16.mxu0 0
    %371 = vmatpush1.bf16.msra.mxu0 %v343
    %372 = vmatprep.subr.bf16.mxu0 0
    %373 = vmatpush1.bf16.msra.mxu0 %v342
    %374 = vmatprep.subr.bf16.mxu0 0
    %375 = vmatpush2.bf16.msra.mxu0 0
    %376 = vmatprep.subr.bf16.mxu0 0
    %377 = vmatpush2.bf16.msra.mxu0 0
    %378 = vmatprep.subr.bf16.mxu0 0
    %379 = vmatpush2.bf16.msra.mxu0 0
    %380 = vmatprep.subr.bf16.mxu0 0
    %381 = vmatpush2.bf16.msra.mxu0 0
    %382 = vmatprep.subr.bf16.mxu0 0
    %383 = vmatpush2.bf16.msra.mxu0 0
    %384 = vmatprep.subr.bf16.mxu0 0
    %385 = vmatpush2.bf16.msra.mxu0 0
    %386 = vmatprep.subr.bf16.mxu0 0
    %387 = vmatpush2.bf16.msra.mxu0 0
    %388 = vmatprep.subr.bf16.mxu0 0
    %389 = vmatpush2.bf16.msra.mxu0 0
    %390 = vmatprep.mubr.bf16.mxu0 0
    %391 = vmatmul.mubr.bf16.gmra.mxu0 %v284
    %v392 = vpop.f32.mrf.mxu0
    %v393 = vadd.f32 %v308, %v392
    %v394 = vpop.f32.mrf.mxu0
    %v395 = vpop.f32.mrf.mxu0
    %v396 = vpop.f32.mrf.mxu0
    %397 = vdwg.mxu0
    %v398 = vmax.f32 %v393, 0.0
    %v399 = vpack.c.bf16 %v398, %v398
    %s400 = scalar_lea.vmem [#allocation5], 192
    %v401 = vld [vmem:[%s400] sm:$0xf]
    %v402 = vld [vmem:[%s400 + $0x4] sm:$0xf]
    %v403 = vld [vmem:[%s400 + $0x8] sm:$0xf]
    %v404 = vld [vmem:[%s400 + $0xc] sm:$0xf]
    %v405 = vld [vmem:[%s400 + $0x10] sm:$0xf]
    %v406 = vld [vmem:[%s400 + $0x14] sm:$0xf]
    %v407 = vld [vmem:[%s400 + $0x18] sm:$0xf]
    %v408 = vld [vmem:[%s400 + $0x1c] sm:$0xf]
    %v409 = vld [vmem:[%s400 + $0x20] sm:$0xf]
    %v410 = vld [vmem:[%s400 + $0x24] sm:$0xf]
    %v411 = vld [vmem:[%s400 + $0x28] sm:$0xf]
    %v412 = vld [vmem:[%s400 + $0x2c] sm:$0xf]
    %v413 = vld [vmem:[%s400 + $0x30] sm:$0xf]
    %v414 = vld [vmem:[%s400 + $0x34] sm:$0xf]
    %v415 = vld [vmem:[%s400 + $0x38] sm:$0xf]
    %v416 = vld [vmem:[%s400 + $0x3c] sm:$0xf]
    %s417 = scalar_lea.vmem [#allocation7], 3
    %v418 = vld [vmem:[%s417] sm:$0x1]
    %v420 = vlaneseq
    %v421 = vshrl.u32 %v420, 7
    %v422 = vsub.s32 0, %v421
    %v423 = vrot.slane %v418, %v422
    %v441 = vunpack.c.l.b16 %v401
    %v442 = vunpack.c.l.b16 %v402
    %v443 = vunpack.c.l.b16 %v403
    %v444 = vunpack.c.l.b16 %v404
    %v445 = vunpack.c.l.b16 %v405
    %v446 = vunpack.c.l.b16 %v406
    %v447 = vunpack.c.l.b16 %v407
    %v448 = vunpack.c.l.b16 %v408
    %v449 = vunpack.c.l.b16 %v409
    %v450 = vunpack.c.l.b16 %v410
    %v451 = vunpack.c.l.b16 %v411
    %v452 = vunpack.c.l.b16 %v412
    %v453 = vunpack.c.l.b16 %v413
    %v454 = vunpack.c.l.b16 %v414
    %v455 = vunpack.c.l.b16 %v415
    %v456 = vunpack.c.l.b16 %v416
    %v457 = vpack.c.b16 %v442, %v441
    %v458 = vpack.c.b16 %v444, %v443
    %v459 = vpack.c.b16 %v446, %v445
    %v460 = vpack.c.b16 %v448, %v447
    %v461 = vpack.c.b16 %v450, %v449
    %v462 = vpack.c.b16 %v452, %v451
    %v463 = vpack.c.b16 %v454, %v453
    %v464 = vpack.c.b16 %v456, %v455
    %473 = vmatprep.subr.bf16.mxu0 0
    %474 = vmatpush1.bf16.msra.mxu0 %v464
    %475 = vmatprep.subr.bf16.mxu0 0
    %476 = vmatpush1.bf16.msra.mxu0 %v463
    %477 = vmatprep.subr.bf16.mxu0 0
    %478 = vmatpush1.bf16.msra.mxu0 %v462
    %479 = vmatprep.subr.bf16.mxu0 0
    %480 = vmatpush1.bf16.msra.mxu0 %v461
    %481 = vmatprep.subr.bf16.mxu0 0
    %482 = vmatpush1.bf16.msra.mxu0 %v460
    %483 = vmatprep.subr.bf16.mxu0 0
    %484 = vmatpush1.bf16.msra.mxu0 %v459
    %485 = vmatprep.subr.bf16.mxu0 0
    %486 = vmatpush1.bf16.msra.mxu0 %v458
    %487 = vmatprep.subr.bf16.mxu0 0
    %488 = vmatpush1.bf16.msra.mxu0 %v457
    %489 = vmatprep.subr.bf16.mxu0 0
    %490 = vmatpush2.bf16.msra.mxu0 0
    %491 = vmatprep.subr.bf16.mxu0 0
    %492 = vmatpush2.bf16.msra.mxu0 0
    %493 = vmatprep.subr.bf16.mxu0 0
    %494 = vmatpush2.bf16.msra.mxu0 0
    %495 = vmatprep.subr.bf16.mxu0 0
    %496 = vmatpush2.bf16.msra.mxu0 0
    %497 = vmatprep.subr.bf16.mxu0 0
    %498 = vmatpush2.bf16.msra.mxu0 0
    %499 = vmatprep.subr.bf16.mxu0 0
    %500 = vmatpush2.bf16.msra.mxu0 0
    %501 = vmatprep.subr.bf16.mxu0 0
    %502 = vmatpush2.bf16.msra.mxu0 0
    %503 = vmatprep.subr.bf16.mxu0 0
    %504 = vmatpush2.bf16.msra.mxu0 0
    %505 = vmatprep.mubr.bf16.mxu0 0
    %506 = vmatmul.mubr.bf16.gmra.mxu0 %v399
    %v507 = vpop.f32.mrf.mxu0
    %v508 = vadd.f32 %v423, %v507
    %v509 = vpop.f32.mrf.mxu0
    %v510 = vpop.f32.mrf.mxu0
    %v511 = vpop.f32.mrf.mxu0
    %512 = vdwg.mxu0
    %v513 = vmax.f32 %v508, 0.0
    %v514 = vpack.c.bf16 %v513, %v513
    %s515 = scalar_lea.vmem [#allocation5], 256
    %v516 = vld [vmem:[%s515] sm:$0xf]
    %v517 = vld [vmem:[%s515 + $0x4] sm:$0xf]
    %v518 = vld [vmem:[%s515 + $0x8] sm:$0xf]
    %v519 = vld [vmem:[%s515 + $0xc] sm:$0xf]
    %v520 = vld [vmem:[%s515 + $0x10] sm:$0xf]
    %v521 = vld [vmem:[%s515 + $0x14] sm:$0xf]
    %v522 = vld [vmem:[%s515 + $0x18] sm:$0xf]
    %v523 = vld [vmem:[%s515 + $0x1c] sm:$0xf]
    %v524 = vld [vmem:[%s515 + $0x20] sm:$0xf]
    %v525 = vld [vmem:[%s515 + $0x24] sm:$0xf]
    %v526 = vld [vmem:[%s515 + $0x28] sm:$0xf]
    %v527 = vld [vmem:[%s515 + $0x2c] sm:$0xf]
    %v528 = vld [vmem:[%s515 + $0x30] sm:$0xf]
    %v529 = vld [vmem:[%s515 + $0x34] sm:$0xf]
    %v530 = vld [vmem:[%s515 + $0x38] sm:$0xf]
    %v531 = vld [vmem:[%s515 + $0x3c] sm:$0xf]
    %s532 = scalar_lea.vmem [#allocation7], 4
    %v533 = vld [vmem:[%s532] sm:$0x1]
    %v535 = vlaneseq
    %v536 = vshrl.u32 %v535, 7
    %v537 = vsub.s32 0, %v536
    %v538 = vrot.slane %v533, %v537
    %v556 = vunpack.c.l.b16 %v516
    %v557 = vunpack.c.l.b16 %v517
    %v558 = vunpack.c.l.b16 %v518
    %v559 = vunpack.c.l.b16 %v519
    %v560 = vunpack.c.l.b16 %v520
    %v561 = vunpack.c.l.b16 %v521
    %v562 = vunpack.c.l.b16 %v522
    %v563 = vunpack.c.l.b16 %v523
    %v564 = vunpack.c.l.b16 %v524
    %v565 = vunpack.c.l.b16 %v525
    %v566 = vunpack.c.l.b16 %v526
    %v567 = vunpack.c.l.b16 %v527
    %v568 = vunpack.c.l.b16 %v528
    %v569 = vunpack.c.l.b16 %v529
    %v570 = vunpack.c.l.b16 %v530
    %v571 = vunpack.c.l.b16 %v531
    %v572 = vpack.c.b16 %v557, %v556
    %v573 = vpack.c.b16 %v559, %v558
    %v574 = vpack.c.b16 %v561, %v560
    %v575 = vpack.c.b16 %v563, %v562
    %v576 = vpack.c.b16 %v565, %v564
    %v577 = vpack.c.b16 %v567, %v566
    %v578 = vpack.c.b16 %v569, %v568
    %v579 = vpack.c.b16 %v571, %v570
    %588 = vmatprep.subr.bf16.mxu0 0
    %589 = vmatpush1.bf16.msra.mxu0 %v579
    %590 = vmatprep.subr.bf16.mxu0 0
    %591 = vmatpush1.bf16.msra.mxu0 %v578
    %592 = vmatprep.subr.bf16.mxu0 0
    %593 = vmatpush1.bf16.msra.mxu0 %v577
    %594 = vmatprep.subr.bf16.mxu0 0
    %595 = vmatpush1.bf16.msra.mxu0 %v576
    %596 = vmatprep.subr.bf16.mxu0 0
    %597 = vmatpush1.bf16.msra.mxu0 %v575
    %598 = vmatprep.subr.bf16.mxu0 0
    %599 = vmatpush1.bf16.msra.mxu0 %v574
    %600 = vmatprep.subr.bf16.mxu0 0
    %601 = vmatpush1.bf16.msra.mxu0 %v573
    %602 = vmatprep.subr.bf16.mxu0 0
    %603 = vmatpush1.bf16.msra.mxu0 %v572
    %604 = vmatprep.subr.bf16.mxu0 0
    %605 = vmatpush2.bf16.msra.mxu0 0
    %606 = vmatprep.subr.bf16.mxu0 0
    %607 = vmatpush2.bf16.msra.mxu0 0
    %608 = vmatprep.subr.bf16.mxu0 0
    %609 = vmatpush2.bf16.msra.mxu0 0
    %610 = vmatprep.subr.bf16.mxu0 0
    %611 = vmatpush2.bf16.msra.mxu0 0
    %612 = vmatprep.subr.bf16.mxu0 0
    %613 = vmatpush2.bf16.msra.mxu0 0
    %614 = vmatprep.subr.bf16.mxu0 0
    %615 = vmatpush2.bf16.msra.mxu0 0
    %616 = vmatprep.subr.bf16.mxu0 0
    %617 = vmatpush2.bf16.msra.mxu0 0
    %618 = vmatprep.subr.bf16.mxu0 0
    %619 = vmatpush2.bf16.msra.mxu0 0
    %620 = vmatprep.mubr.bf16.mxu0 0
    %621 = vmatmul.mubr.bf16.gmra.mxu0 %v514
    %v622 = vpop.f32.mrf.mxu0
    %v623 = vadd.f32 %v538, %v622
    %v624 = vpop.f32.mrf.mxu0
    %v625 = vpop.f32.mrf.mxu0
    %v626 = vpop.f32.mrf.mxu0
    %627 = vdwg.mxu0
    %v628 = vmax.f32 %v623, 0.0
    %v629 = vpack.c.bf16 %v628, %v628
    %s630 = scalar_lea.vmem [#allocation5], 320
    %v631 = vld [vmem:[%s630] sm:$0xf]
    %v632 = vld [vmem:[%s630 + $0x4] sm:$0xf]
    %v633 = vld [vmem:[%s630 + $0x8] sm:$0xf]
    %v634 = vld [vmem:[%s630 + $0xc] sm:$0xf]
    %v635 = vld [vmem:[%s630 + $0x10] sm:$0xf]
    %v636 = vld [vmem:[%s630 + $0x14] sm:$0xf]
    %v637 = vld [vmem:[%s630 + $0x18] sm:$0xf]
    %v638 = vld [vmem:[%s630 + $0x1c] sm:$0xf]
    %v639 = vld [vmem:[%s630 + $0x20] sm:$0xf]
    %v640 = vld [vmem:[%s630 + $0x24] sm:$0xf]
    %v641 = vld [vmem:[%s630 + $0x28] sm:$0xf]
    %v642 = vld [vmem:[%s630 + $0x2c] sm:$0xf]
    %v643 = vld [vmem:[%s630 + $0x30] sm:$0xf]
    %v644 = vld [vmem:[%s630 + $0x34] sm:$0xf]
    %v645 = vld [vmem:[%s630 + $0x38] sm:$0xf]
    %v646 = vld [vmem:[%s630 + $0x3c] sm:$0xf]
    %s647 = scalar_lea.vmem [#allocation7], 5
    %v648 = vld [vmem:[%s647] sm:$0x1]
    %v650 = vlaneseq
    %v651 = vshrl.u32 %v650, 7
    %v652 = vsub.s32 0, %v651
    %v653 = vrot.slane %v648, %v652
    %v671 = vunpack.c.l.b16 %v631
    %v672 = vunpack.c.l.b16 %v632
    %v673 = vunpack.c.l.b16 %v633
    %v674 = vunpack.c.l.b16 %v634
    %v675 = vunpack.c.l.b16 %v635
    %v676 = vunpack.c.l.b16 %v636
    %v677 = vunpack.c.l.b16 %v637
    %v678 = vunpack.c.l.b16 %v638
    %v679 = vunpack.c.l.b16 %v639
    %v680 = vunpack.c.l.b16 %v640
    %v681 = vunpack.c.l.b16 %v641
    %v682 = vunpack.c.l.b16 %v642
    %v683 = vunpack.c.l.b16 %v643
    %v684 = vunpack.c.l.b16 %v644
    %v685 = vunpack.c.l.b16 %v645
    %v686 = vunpack.c.l.b16 %v646
    %v687 = vpack.c.b16 %v672, %v671
    %v688 = vpack.c.b16 %v674, %v673
    %v689 = vpack.c.b16 %v676, %v675
    %v690 = vpack.c.b16 %v678, %v677
    %v691 = vpack.c.b16 %v680, %v679
    %v692 = vpack.c.b16 %v682, %v681
    %v693 = vpack.c.b16 %v684, %v683
    %v694 = vpack.c.b16 %v686, %v685
    %703 = vmatprep.subr.bf16.mxu0 0
    %704 = vmatpush1.bf16.msra.mxu0 %v694
    %705 = vmatprep.subr.bf16.mxu0 0
    %706 = vmatpush1.bf16.msra.mxu0 %v693
    %707 = vmatprep.subr.bf16.mxu0 0
    %708 = vmatpush1.bf16.msra.mxu0 %v692
    %709 = vmatprep.subr.bf16.mxu0 0
    %710 = vmatpush1.bf16.msra.mxu0 %v691
    %711 = vmatprep.subr.bf16.mxu0 0
    %712 = vmatpush1.bf16.msra.mxu0 %v690
    %713 = vmatprep.subr.bf16.mxu0 0
    %714 = vmatpush1.bf16.msra.mxu0 %v689
    %715 = vmatprep.subr.bf16.mxu0 0
    %716 = vmatpush1.bf16.msra.mxu0 %v688
    %717 = vmatprep.subr.bf16.mxu0 0
    %718 = vmatpush1.bf16.msra.mxu0 %v687
    %719 = vmatprep.subr.bf16.mxu0 0
    %720 = vmatpush2.bf16.msra.mxu0 0
    %721 = vmatprep.subr.bf16.mxu0 0
    %722 = vmatpush2.bf16.msra.mxu0 0
    %723 = vmatprep.subr.bf16.mxu0 0
    %724 = vmatpush2.bf16.msra.mxu0 0
    %725 = vmatprep.subr.bf16.mxu0 0
    %726 = vmatpush2.bf16.msra.mxu0 0
    %727 = vmatprep.subr.bf16.mxu0 0
    %728 = vmatpush2.bf16.msra.mxu0 0
    %729 = vmatprep.subr.bf16.mxu0 0
    %730 = vmatpush2.bf16.msra.mxu0 0
    %731 = vmatprep.subr.bf16.mxu0 0
    %732 = vmatpush2.bf16.msra.mxu0 0
    %733 = vmatprep.subr.bf16.mxu0 0
    %734 = vmatpush2.bf16.msra.mxu0 0
    %735 = vmatprep.mubr.bf16.mxu0 0
    %736 = vmatmul.mubr.bf16.gmra.mxu0 %v629
    %v737 = vpop.f32.mrf.mxu0
    %v738 = vadd.f32 %v653, %v737
    %v739 = vpop.f32.mrf.mxu0
    %v740 = vpop.f32.mrf.mxu0
    %v741 = vpop.f32.mrf.mxu0
    %742 = vdwg.mxu0
    %v743 = vpack.c.bf16 %v738, %v738
    %s744 = scalar_lea.vmem [#allocation5], 384
    %v745 = vld [vmem:[%s744] sm:$0xf]
    %v746 = vld [vmem:[%s744 + $0x4] sm:$0xf]
    %v747 = vld [vmem:[%s744 + $0x8] sm:$0xf]
    %v748 = vld [vmem:[%s744 + $0xc] sm:$0xf]
    %v749 = vld [vmem:[%s744 + $0x10] sm:$0xf]
    %v750 = vld [vmem:[%s744 + $0x14] sm:$0xf]
    %v751 = vld [vmem:[%s744 + $0x18] sm:$0xf]
    %v752 = vld [vmem:[%s744 + $0x1c] sm:$0xf]
    %v753 = vld [vmem:[%s744 + $0x20] sm:$0xf]
    %v754 = vld [vmem:[%s744 + $0x24] sm:$0xf]
    %v755 = vld [vmem:[%s744 + $0x28] sm:$0xf]
    %v756 = vld [vmem:[%s744 + $0x2c] sm:$0xf]
    %v757 = vld [vmem:[%s744 + $0x30] sm:$0xf]
    %v758 = vld [vmem:[%s744 + $0x34] sm:$0xf]
    %v759 = vld [vmem:[%s744 + $0x38] sm:$0xf]
    %v760 = vld [vmem:[%s744 + $0x3c] sm:$0xf]
    %s761 = scalar_lea.vmem [#allocation7], 6
    %v762 = vld [vmem:[%s761] sm:$0x1]
    %v764 = vlaneseq
    %v765 = vshrl.u32 %v764, 7
    %v766 = vsub.s32 0, %v765
    %v767 = vrot.slane %v762, %v766
    %v785 = vunpack.c.l.b16 %v745
    %v786 = vunpack.c.l.b16 %v746
    %v787 = vunpack.c.l.b16 %v747
    %v788 = vunpack.c.l.b16 %v748
    %v789 = vunpack.c.l.b16 %v749
    %v790 = vunpack.c.l.b16 %v750
    %v791 = vunpack.c.l.b16 %v751
    %v792 = vunpack.c.l.b16 %v752
    %v793 = vunpack.c.l.b16 %v753
    %v794 = vunpack.c.l.b16 %v754
    %v795 = vunpack.c.l.b16 %v755
    %v796 = vunpack.c.l.b16 %v756
    %v797 = vunpack.c.l.b16 %v757
    %v798 = vunpack.c.l.b16 %v758
    %v799 = vunpack.c.l.b16 %v759
    %v800 = vunpack.c.l.b16 %v760
    %v801 = vpack.c.b16 %v786, %v785
    %v802 = vpack.c.b16 %v788, %v787
    %v803 = vpack.c.b16 %v790, %v789
    %v804 = vpack.c.b16 %v792, %v791
    %v805 = vpack.c.b16 %v794, %v793
    %v806 = vpack.c.b16 %v796, %v795
    %v807 = vpack.c.b16 %v798, %v797
    %v808 = vpack.c.b16 %v800, %v799
    %817 = vmatprep.subr.bf16.mxu0 0
    %818 = vmatpush1.bf16.msra.mxu0 %v808
    %819 = vmatprep.subr.bf16.mxu0 0
    %820 = vmatpush1.bf16.msra.mxu0 %v807
    %821 = vmatprep.subr.bf16.mxu0 0
    %822 = vmatpush1.bf16.msra.mxu0 %v806
    %823 = vmatprep.subr.bf16.mxu0 0
    %824 = vmatpush1.bf16.msra.mxu0 %v805
    %825 = vmatprep.subr.bf16.mxu0 0
    %826 = vmatpush1.bf16.msra.mxu0 %v804
    %827 = vmatprep.subr.bf16.mxu0 0
    %828 = vmatpush1.bf16.msra.mxu0 %v803
    %829 = vmatprep.subr.bf16.mxu0 0
    %830 = vmatpush1.bf16.msra.mxu0 %v802
    %831 = vmatprep.subr.bf16.mxu0 0
    %832 = vmatpush1.bf16.msra.mxu0 %v801
    %833 = vmatprep.subr.bf16.mxu0 0
    %834 = vmatpush2.bf16.msra.mxu0 0
    %835 = vmatprep.subr.bf16.mxu0 0
    %836 = vmatpush2.bf16.msra.mxu0 0
    %837 = vmatprep.subr.bf16.mxu0 0
    %838 = vmatpush2.bf16.msra.mxu0 0
    %839 = vmatprep.subr.bf16.mxu0 0
    %840 = vmatpush2.bf16.msra.mxu0 0
    %841 = vmatprep.subr.bf16.mxu0 0
    %842 = vmatpush2.bf16.msra.mxu0 0
    %843 = vmatprep.subr.bf16.mxu0 0
    %844 = vmatpush2.bf16.msra.mxu0 0
    %845 = vmatprep.subr.bf16.mxu0 0
    %846 = vmatpush2.bf16.msra.mxu0 0
    %847 = vmatprep.subr.bf16.mxu0 0
    %848 = vmatpush2.bf16.msra.mxu0 0
    %849 = vmatprep.mubr.bf16.mxu0 0
    %850 = vmatmul.mubr.bf16.gmra.mxu0 %v743
    %v851 = vpop.f32.mrf.mxu0
    %v852 = vadd.f32 %v767, %v851
    %v853 = vpop.f32.mrf.mxu0
    %v854 = vpop.f32.mrf.mxu0
    %v855 = vpop.f32.mrf.mxu0
    %856 = vdwg.mxu0
    %v857 = vmax.f32 %v852, 0.0
    %v858 = vpack.c.bf16 %v857, %v857
    %s859 = scalar_lea.vmem [#allocation5], 448
    %v860 = vld [vmem:[%s859] sm:$0xf]
    %v861 = vld [vmem:[%s859 + $0x4] sm:$0xf]
    %v862 = vld [vmem:[%s859 + $0x8] sm:$0xf]
    %v863 = vld [vmem:[%s859 + $0xc] sm:$0xf]
    %v864 = vld [vmem:[%s859 + $0x10] sm:$0xf]
    %v865 = vld [vmem:[%s859 + $0x14] sm:$0xf]
    %v866 = vld [vmem:[%s859 + $0x18] sm:$0xf]
    %v867 = vld [vmem:[%s859 + $0x1c] sm:$0xf]
    %v868 = vld [vmem:[%s859 + $0x20] sm:$0xf]
    %v869 = vld [vmem:[%s859 + $0x24] sm:$0xf]
    %v870 = vld [vmem:[%s859 + $0x28] sm:$0xf]
    %v871 = vld [vmem:[%s859 + $0x2c] sm:$0xf]
    %v872 = vld [vmem:[%s859 + $0x30] sm:$0xf]
    %v873 = vld [vmem:[%s859 + $0x34] sm:$0xf]
    %v874 = vld [vmem:[%s859 + $0x38] sm:$0xf]
    %v875 = vld [vmem:[%s859 + $0x3c] sm:$0xf]
    %s876 = scalar_lea.vmem [#allocation7], 7
    %v877 = vld [vmem:[%s876] sm:$0x1]
    %v879 = vlaneseq
    %v880 = vshrl.u32 %v879, 7
    %v881 = vsub.s32 0, %v880
    %v882 = vrot.slane %v877, %v881
    %v900 = vunpack.c.l.b16 %v860
    %v901 = vunpack.c.l.b16 %v861
    %v902 = vunpack.c.l.b16 %v862
    %v903 = vunpack.c.l.b16 %v863
    %v904 = vunpack.c.l.b16 %v864
    %v905 = vunpack.c.l.b16 %v865
    %v906 = vunpack.c.l.b16 %v866
    %v907 = vunpack.c.l.b16 %v867
    %v908 = vunpack.c.l.b16 %v868
    %v909 = vunpack.c.l.b16 %v869
    %v910 = vunpack.c.l.b16 %v870
    %v911 = vunpack.c.l.b16 %v871
    %v912 = vunpack.c.l.b16 %v872
    %v913 = vunpack.c.l.b16 %v873
    %v914 = vunpack.c.l.b16 %v874
    %v915 = vunpack.c.l.b16 %v875
    %v916 = vpack.c.b16 %v901, %v900
    %v917 = vpack.c.b16 %v903, %v902
    %v918 = vpack.c.b16 %v905, %v904
    %v919 = vpack.c.b16 %v907, %v906
    %v920 = vpack.c.b16 %v909, %v908
    %v921 = vpack.c.b16 %v911, %v910
    %v922 = vpack.c.b16 %v913, %v912
    %v923 = vpack.c.b16 %v915, %v914
    %932 = vmatprep.subr.bf16.mxu0 0
    %933 = vmatpush1.bf16.msra.mxu0 %v923
    %934 = vmatprep.subr.bf16.mxu0 0
    %935 = vmatpush1.bf16.msra.mxu0 %v922
    %936 = vmatprep.subr.bf16.mxu0 0
    %937 = vmatpush1.bf16.msra.mxu0 %v921
    %938 = vmatprep.subr.bf16.mxu0 0
    %939 = vmatpush1.bf16.msra.mxu0 %v920
    %940 = vmatprep.subr.bf16.mxu0 0
    %941 = vmatpush1.bf16.msra.mxu0 %v919
    %942 = vmatprep.subr.bf16.mxu0 0
    %943 = vmatpush1.bf16.msra.mxu0 %v918
    %944 = vmatprep.subr.bf16.mxu0 0
    %945 = vmatpush1.bf16.msra.mxu0 %v917
    %946 = vmatprep.subr.bf16.mxu0 0
    %947 = vmatpush1.bf16.msra.mxu0 %v916
    %948 = vmatprep.subr.bf16.mxu0 0
    %949 = vmatpush2.bf16.msra.mxu0 0
    %950 = vmatprep.subr.bf16.mxu0 0
    %951 = vmatpush2.bf16.msra.mxu0 0
    %952 = vmatprep.subr.bf16.mxu0 0
    %953 = vmatpush2.bf16.msra.mxu0 0
    %954 = vmatprep.subr.bf16.mxu0 0
    %955 = vmatpush2.bf16.msra.mxu0 0
    %956 = vmatprep.subr.bf16.mxu0 0
    %957 = vmatpush2.bf16.msra.mxu0 0
    %958 = vmatprep.subr.bf16.mxu0 0
    %959 = vmatpush2.bf16.msra.mxu0 0
    %960 = vmatprep.subr.bf16.mxu0 0
    %961 = vmatpush2.bf16.msra.mxu0 0
    %962 = vmatprep.subr.bf16.mxu0 0
    %963 = vmatpush2.bf16.msra.mxu0 0
    %964 = vmatprep.mubr.bf16.mxu0 0
    %965 = vmatmul.mubr.bf16.gmra.mxu0 %v858
    %v966 = vpop.f32.mrf.mxu0
    %v967 = vadd.f32 %v882, %v966
    %v968 = vpop.f32.mrf.mxu0
    %v969 = vpop.f32.mrf.mxu0
    %v970 = vpop.f32.mrf.mxu0
    %971 = vdwg.mxu0
    %v972 = vmax.f32 %v967, 0.0
    %v973 = vpack.c.bf16 %v972, %v972
    %s974 = scalar_lea.vmem [#allocation5], 512
    %v975 = vld [vmem:[%s974] sm:$0xf]
    %v976 = vld [vmem:[%s974 + $0x4] sm:$0xf]
    %v977 = vld [vmem:[%s974 + $0x8] sm:$0xf]
    %v978 = vld [vmem:[%s974 + $0xc] sm:$0xf]
    %v979 = vld [vmem:[%s974 + $0x10] sm:$0xf]
    %v980 = vld [vmem:[%s974 + $0x14] sm:$0xf]
    %v981 = vld [vmem:[%s974 + $0x18] sm:$0xf]
    %v982 = vld [vmem:[%s974 + $0x1c] sm:$0xf]
    %v983 = vld [vmem:[%s974 + $0x20] sm:$0xf]
    %v984 = vld [vmem:[%s974 + $0x24] sm:$0xf]
    %v985 = vld [vmem:[%s974 + $0x28] sm:$0xf]
    %v986 = vld [vmem:[%s974 + $0x2c] sm:$0xf]
    %v987 = vld [vmem:[%s974 + $0x30] sm:$0xf]
    %v988 = vld [vmem:[%s974 + $0x34] sm:$0xf]
    %v989 = vld [vmem:[%s974 + $0x38] sm:$0xf]
    %v990 = vld [vmem:[%s974 + $0x3c] sm:$0xf]
    %s991 = scalar_lea.vmem [#allocation7], 8
    %v992 = vld [vmem:[%s991] sm:$0x1]
    %v994 = vlaneseq
    %v995 = vshrl.u32 %v994, 7
    %v996 = vsub.s32 0, %v995
    %v997 = vrot.slane %v992, %v996
    %v1015 = vunpack.c.l.b16 %v975
    %v1016 = vunpack.c.l.b16 %v976
    %v1017 = vunpack.c.l.b16 %v977
    %v1018 = vunpack.c.l.b16 %v978
    %v1019 = vunpack.c.l.b16 %v979
    %v1020 = vunpack.c.l.b16 %v980
    %v1021 = vunpack.c.l.b16 %v981
    %v1022 = vunpack.c.l.b16 %v982
    %v1023 = vunpack.c.l.b16 %v983
    %v1024 = vunpack.c.l.b16 %v984
    %v1025 = vunpack.c.l.b16 %v985
    %v1026 = vunpack.c.l.b16 %v986
    %v1027 = vunpack.c.l.b16 %v987
    %v1028 = vunpack.c.l.b16 %v988
    %v1029 = vunpack.c.l.b16 %v989
    %v1030 = vunpack.c.l.b16 %v990
    %v1031 = vpack.c.b16 %v1016, %v1015
    %v1032 = vpack.c.b16 %v1018, %v1017
    %v1033 = vpack.c.b16 %v1020, %v1019
    %v1034 = vpack.c.b16 %v1022, %v1021
    %v1035 = vpack.c.b16 %v1024, %v1023
    %v1036 = vpack.c.b16 %v1026, %v1025
    %v1037 = vpack.c.b16 %v1028, %v1027
    %v1038 = vpack.c.b16 %v1030, %v1029
    %1047 = vmatprep.subr.bf16.mxu0 0
    %1048 = vmatpush1.bf16.msra.mxu0 %v1038
    %1049 = vmatprep.subr.bf16.mxu0 0
    %1050 = vmatpush1.bf16.msra.mxu0 %v1037
    %1051 = vmatprep.subr.bf16.mxu0 0
    %1052 = vmatpush1.bf16.msra.mxu0 %v1036
    %1053 = vmatprep.subr.bf16.mxu0 0
    %1054 = vmatpush1.bf16.msra.mxu0 %v1035
    %1055 = vmatprep.subr.bf16.mxu0 0
    %1056 = vmatpush1.bf16.msra.mxu0 %v1034
    %1057 = vmatprep.subr.bf16.mxu0 0
    %1058 = vmatpush1.bf16.msra.mxu0 %v1033
    %1059 = vmatprep.subr.bf16.mxu0 0
    %1060 = vmatpush1.bf16.msra.mxu0 %v1032
    %1061 = vmatprep.subr.bf16.mxu0 0
    %1062 = vmatpush1.bf16.msra.mxu0 %v1031
    %1063 = vmatprep.subr.bf16.mxu0 0
    %1064 = vmatpush2.bf16.msra.mxu0 0
    %1065 = vmatprep.subr.bf16.mxu0 0
    %1066 = vmatpush2.bf16.msra.mxu0 0
    %1067 = vmatprep.subr.bf16.mxu0 0
    %1068 = vmatpush2.bf16.msra.mxu0 0
    %1069 = vmatprep.subr.bf16.mxu0 0
    %1070 = vmatpush2.bf16.msra.mxu0 0
    %1071 = vmatprep.subr.bf16.mxu0 0
    %1072 = vmatpush2.bf16.msra.mxu0 0
    %1073 = vmatprep.subr.bf16.mxu0 0
    %1074 = vmatpush2.bf16.msra.mxu0 0
    %1075 = vmatprep.subr.bf16.mxu0 0
    %1076 = vmatpush2.bf16.msra.mxu0 0
    %1077 = vmatprep.subr.bf16.mxu0 0
    %1078 = vmatpush2.bf16.msra.mxu0 0
    %1079 = vmatprep.mubr.bf16.mxu0 0
    %1080 = vmatmul.mubr.bf16.gmra.mxu0 %v973
    %v1081 = vpop.f32.mrf.mxu0
    %v1082 = vadd.f32 %v997, %v1081
    %v1083 = vpop.f32.mrf.mxu0
    %v1084 = vpop.f32.mrf.mxu0
    %v1085 = vpop.f32.mrf.mxu0
    %1086 = vdwg.mxu0
    %v1087 = vmax.f32 %v1082, 0.0
    %v1088 = vpack.c.bf16 %v1087, %v1087
    %s1089 = scalar_lea.vmem [#allocation5], 576
    %v1090 = vld [vmem:[%s1089] sm:$0xf]
    %v1091 = vld [vmem:[%s1089 + $0x4] sm:$0xf]
    %v1092 = vld [vmem:[%s1089 + $0x8] sm:$0xf]
    %v1093 = vld [vmem:[%s1089 + $0xc] sm:$0xf]
    %v1094 = vld [vmem:[%s1089 + $0x10] sm:$0xf]
    %v1095 = vld [vmem:[%s1089 + $0x14] sm:$0xf]
    %v1096 = vld [vmem:[%s1089 + $0x18] sm:$0xf]
    %v1097 = vld [vmem:[%s1089 + $0x1c] sm:$0xf]
    %v1098 = vld [vmem:[%s1089 + $0x20] sm:$0xf]
    %v1099 = vld [vmem:[%s1089 + $0x24] sm:$0xf]
    %v1100 = vld [vmem:[%s1089 + $0x28] sm:$0xf]
    %v1101 = vld [vmem:[%s1089 + $0x2c] sm:$0xf]
    %v1102 = vld [vmem:[%s1089 + $0x30] sm:$0xf]
    %v1103 = vld [vmem:[%s1089 + $0x34] sm:$0xf]
    %v1104 = vld [vmem:[%s1089 + $0x38] sm:$0xf]
    %v1105 = vld [vmem:[%s1089 + $0x3c] sm:$0xf]
    %s1106 = scalar_lea.vmem [#allocation7], 9
    %v1107 = vld [vmem:[%s1106] sm:$0x1]
    %v1109 = vlaneseq
    %v1110 = vshrl.u32 %v1109, 7
    %v1111 = vsub.s32 0, %v1110
    %v1112 = vrot.slane %v1107, %v1111
    %v1130 = vunpack.c.l.b16 %v1090
    %v1131 = vunpack.c.l.b16 %v1091
    %v1132 = vunpack.c.l.b16 %v1092
    %v1133 = vunpack.c.l.b16 %v1093
    %v1134 = vunpack.c.l.b16 %v1094
    %v1135 = vunpack.c.l.b16 %v1095
    %v1136 = vunpack.c.l.b16 %v1096
    %v1137 = vunpack.c.l.b16 %v1097
    %v1138 = vunpack.c.l.b16 %v1098
    %v1139 = vunpack.c.l.b16 %v1099
    %v1140 = vunpack.c.l.b16 %v1100
    %v1141 = vunpack.c.l.b16 %v1101
    %v1142 = vunpack.c.l.b16 %v1102
    %v1143 = vunpack.c.l.b16 %v1103
    %v1144 = vunpack.c.l.b16 %v1104
    %v1145 = vunpack.c.l.b16 %v1105
    %v1146 = vpack.c.b16 %v1131, %v1130
    %v1147 = vpack.c.b16 %v1133, %v1132
    %v1148 = vpack.c.b16 %v1135, %v1134
    %v1149 = vpack.c.b16 %v1137, %v1136
    %v1150 = vpack.c.b16 %v1139, %v1138
    %v1151 = vpack.c.b16 %v1141, %v1140
    %v1152 = vpack.c.b16 %v1143, %v1142
    %v1153 = vpack.c.b16 %v1145, %v1144
    %1162 = vmatprep.subr.bf16.mxu0 0
    %1163 = vmatpush1.bf16.msra.mxu0 %v1153
    %1164 = vmatprep.subr.bf16.mxu0 0
    %1165 = vmatpush1.bf16.msra.mxu0 %v1152
    %1166 = vmatprep.subr.bf16.mxu0 0
    %1167 = vmatpush1.bf16.msra.mxu0 %v1151
    %1168 = vmatprep.subr.bf16.mxu0 0
    %1169 = vmatpush1.bf16.msra.mxu0 %v1150
    %1170 = vmatprep.subr.bf16.mxu0 0
    %1171 = vmatpush1.bf16.msra.mxu0 %v1149
    %1172 = vmatprep.subr.bf16.mxu0 0
    %1173 = vmatpush1.bf16.msra.mxu0 %v1148
    %1174 = vmatprep.subr.bf16.mxu0 0
    %1175 = vmatpush1.bf16.msra.mxu0 %v1147
    %1176 = vmatprep.subr.bf16.mxu0 0
    %1177 = vmatpush1.bf16.msra.mxu0 %v1146
    %1178 = vmatprep.subr.bf16.mxu0 0
    %1179 = vmatpush2.bf16.msra.mxu0 0
    %1180 = vmatprep.subr.bf16.mxu0 0
    %1181 = vmatpush2.bf16.msra.mxu0 0
    %1182 = vmatprep.subr.bf16.mxu0 0
    %1183 = vmatpush2.bf16.msra.mxu0 0
    %1184 = vmatprep.subr.bf16.mxu0 0
    %1185 = vmatpush2.bf16.msra.mxu0 0
    %1186 = vmatprep.subr.bf16.mxu0 0
    %1187 = vmatpush2.bf16.msra.mxu0 0
    %1188 = vmatprep.subr.bf16.mxu0 0
    %1189 = vmatpush2.bf16.msra.mxu0 0
    %1190 = vmatprep.subr.bf16.mxu0 0
    %1191 = vmatpush2.bf16.msra.mxu0 0
    %1192 = vmatprep.subr.bf16.mxu0 0
    %1193 = vmatpush2.bf16.msra.mxu0 0
    %1194 = vmatprep.mubr.bf16.mxu0 0
    %1195 = vmatmul.mubr.bf16.gmra.mxu0 %v1088
    %v1196 = vpop.f32.mrf.mxu0
    %v1197 = vadd.f32 %v1112, %v1196
    %v1198 = vpop.f32.mrf.mxu0
    %v1199 = vpop.f32.mrf.mxu0
    %v1200 = vpop.f32.mrf.mxu0
    %1201 = vdwg.mxu0
    %v1202 = vmax.f32 %v1197, 0.0
    %v1203 = vpack.c.bf16 %v1202, %v1202
    %s1204 = scalar_lea.vmem [#allocation5], 640
    %v1205 = vld [vmem:[%s1204] sm:$0xf]
    %v1206 = vld [vmem:[%s1204 + $0x4] sm:$0xf]
    %v1207 = vld [vmem:[%s1204 + $0x8] sm:$0xf]
    %v1208 = vld [vmem:[%s1204 + $0xc] sm:$0xf]
    %v1209 = vld [vmem:[%s1204 + $0x10] sm:$0xf]
    %v1210 = vld [vmem:[%s1204 + $0x14] sm:$0xf]
    %v1211 = vld [vmem:[%s1204 + $0x18] sm:$0xf]
    %v1212 = vld [vmem:[%s1204 + $0x1c] sm:$0xf]
    %v1213 = vld [vmem:[%s1204 + $0x20] sm:$0xf]
    %v1214 = vld [vmem:[%s1204 + $0x24] sm:$0xf]
    %v1215 = vld [vmem:[%s1204 + $0x28] sm:$0xf]
    %v1216 = vld [vmem:[%s1204 + $0x2c] sm:$0xf]
    %v1217 = vld [vmem:[%s1204 + $0x30] sm:$0xf]
    %v1218 = vld [vmem:[%s1204 + $0x34] sm:$0xf]
    %v1219 = vld [vmem:[%s1204 + $0x38] sm:$0xf]
    %v1220 = vld [vmem:[%s1204 + $0x3c] sm:$0xf]
    %s1221 = scalar_lea.vmem [#allocation7], 10
    %v1222 = vld [vmem:[%s1221] sm:$0x1]
    %v1224 = vlaneseq
    %v1225 = vshrl.u32 %v1224, 7
    %v1226 = vsub.s32 0, %v1225
    %v1227 = vrot.slane %v1222, %v1226
    %v1245 = vunpack.c.l.b16 %v1205
    %v1246 = vunpack.c.l.b16 %v1206
    %v1247 = vunpack.c.l.b16 %v1207
    %v1248 = vunpack.c.l.b16 %v1208
    %v1249 = vunpack.c.l.b16 %v1209
    %v1250 = vunpack.c.l.b16 %v1210
    %v1251 = vunpack.c.l.b16 %v1211
    %v1252 = vunpack.c.l.b16 %v1212
    %v1253 = vunpack.c.l.b16 %v1213
    %v1254 = vunpack.c.l.b16 %v1214
    %v1255 = vunpack.c.l.b16 %v1215
    %v1256 = vunpack.c.l.b16 %v1216
    %v1257 = vunpack.c.l.b16 %v1217
    %v1258 = vunpack.c.l.b16 %v1218
    %v1259 = vunpack.c.l.b16 %v1219
    %v1260 = vunpack.c.l.b16 %v1220
    %v1261 = vpack.c.b16 %v1246, %v1245
    %v1262 = vpack.c.b16 %v1248, %v1247
    %v1263 = vpack.c.b16 %v1250, %v1249
    %v1264 = vpack.c.b16 %v1252, %v1251
    %v1265 = vpack.c.b16 %v1254, %v1253
    %v1266 = vpack.c.b16 %v1256, %v1255
    %v1267 = vpack.c.b16 %v1258, %v1257
    %v1268 = vpack.c.b16 %v1260, %v1259
    %1277 = vmatprep.subr.bf16.mxu0 0
    %1278 = vmatpush1.bf16.msra.mxu0 %v1268
    %1279 = vmatprep.subr.bf16.mxu0 0
    %1280 = vmatpush1.bf16.msra.mxu0 %v1267
    %1281 = vmatprep.subr.bf16.mxu0 0
    %1282 = vmatpush1.bf16.msra.mxu0 %v1266
    %1283 = vmatprep.subr.bf16.mxu0 0
    %1284 = vmatpush1.bf16.msra.mxu0 %v1265
    %1285 = vmatprep.subr.bf16.mxu0 0
    %1286 = vmatpush1.bf16.msra.mxu0 %v1264
    %1287 = vmatprep.subr.bf16.mxu0 0
    %1288 = vmatpush1.bf16.msra.mxu0 %v1263
    %1289 = vmatprep.subr.bf16.mxu0 0
    %1290 = vmatpush1.bf16.msra.mxu0 %v1262
    %1291 = vmatprep.subr.bf16.mxu0 0
    %1292 = vmatpush1.bf16.msra.mxu0 %v1261
    %1293 = vmatprep.subr.bf16.mxu0 0
    %1294 = vmatpush2.bf16.msra.mxu0 0
    %1295 = vmatprep.subr.bf16.mxu0 0
    %1296 = vmatpush2.bf16.msra.mxu0 0
    %1297 = vmatprep.subr.bf16.mxu0 0
    %1298 = vmatpush2.bf16.msra.mxu0 0
    %1299 = vmatprep.subr.bf16.mxu0 0
    %1300 = vmatpush2.bf16.msra.mxu0 0
    %1301 = vmatprep.subr.bf16.mxu0 0
    %1302 = vmatpush2.bf16.msra.mxu0 0
    %1303 = vmatprep.subr.bf16.mxu0 0
    %1304 = vmatpush2.bf16.msra.mxu0 0
    %1305 = vmatprep.subr.bf16.mxu0 0
    %1306 = vmatpush2.bf16.msra.mxu0 0
    %1307 = vmatprep.subr.bf16.mxu0 0
    %1308 = vmatpush2.bf16.msra.mxu0 0
    %1309 = vmatprep.mubr.bf16.mxu0 0
    %1310 = vmatmul.mubr.bf16.gmra.mxu0 %v1203
    %v1311 = vpop.f32.mrf.mxu0
    %v1312 = vadd.f32 %v1227, %v1311
    %v1313 = vpop.f32.mrf.mxu0
    %v1314 = vpop.f32.mrf.mxu0
    %v1315 = vpop.f32.mrf.mxu0
    %1316 = vdwg.mxu0
    %v1317 = vmax.f32 %v1312, 0.0
    %v1318 = vpack.c.bf16 %v1317, %v1317
    %s1319 = scalar_lea.vmem [#allocation5], 704
    %v1320 = vld [vmem:[%s1319] sm:$0xf]
    %v1321 = vld [vmem:[%s1319 + $0x4] sm:$0xf]
    %v1322 = vld [vmem:[%s1319 + $0x8] sm:$0xf]
    %v1323 = vld [vmem:[%s1319 + $0xc] sm:$0xf]
    %v1324 = vld [vmem:[%s1319 + $0x10] sm:$0xf]
    %v1325 = vld [vmem:[%s1319 + $0x14] sm:$0xf]
    %v1326 = vld [vmem:[%s1319 + $0x18] sm:$0xf]
    %v1327 = vld [vmem:[%s1319 + $0x1c] sm:$0xf]
    %v1328 = vld [vmem:[%s1319 + $0x20] sm:$0xf]
    %v1329 = vld [vmem:[%s1319 + $0x24] sm:$0xf]
    %v1330 = vld [vmem:[%s1319 + $0x28] sm:$0xf]
    %v1331 = vld [vmem:[%s1319 + $0x2c] sm:$0xf]
    %v1332 = vld [vmem:[%s1319 + $0x30] sm:$0xf]
    %v1333 = vld [vmem:[%s1319 + $0x34] sm:$0xf]
    %v1334 = vld [vmem:[%s1319 + $0x38] sm:$0xf]
    %v1335 = vld [vmem:[%s1319 + $0x3c] sm:$0xf]
    %s1336 = scalar_lea.vmem [#allocation7], 11
    %v1337 = vld [vmem:[%s1336] sm:$0x1]
    %v1339 = vlaneseq
    %v1340 = vshrl.u32 %v1339, 7
    %v1341 = vsub.s32 0, %v1340
    %v1342 = vrot.slane %v1337, %v1341
    %v1360 = vunpack.c.l.b16 %v1320
    %v1361 = vunpack.c.l.b16 %v1321
    %v1362 = vunpack.c.l.b16 %v1322
    %v1363 = vunpack.c.l.b16 %v1323
    %v1364 = vunpack.c.l.b16 %v1324
    %v1365 = vunpack.c.l.b16 %v1325
    %v1366 = vunpack.c.l.b16 %v1326
    %v1367 = vunpack.c.l.b16 %v1327
    %v1368 = vunpack.c.l.b16 %v1328
    %v1369 = vunpack.c.l.b16 %v1329
    %v1370 = vunpack.c.l.b16 %v1330
    %v1371 = vunpack.c.l.b16 %v1331
    %v1372 = vunpack.c.l.b16 %v1332
    %v1373 = vunpack.c.l.b16 %v1333
    %v1374 = vunpack.c.l.b16 %v1334
    %v1375 = vunpack.c.l.b16 %v1335
    %v1376 = vpack.c.b16 %v1361, %v1360
    %v1377 = vpack.c.b16 %v1363, %v1362
    %v1378 = vpack.c.b16 %v1365, %v1364
    %v1379 = vpack.c.b16 %v1367, %v1366
    %v1380 = vpack.c.b16 %v1369, %v1368
    %v1381 = vpack.c.b16 %v1371, %v1370
    %v1382 = vpack.c.b16 %v1373, %v1372
    %v1383 = vpack.c.b16 %v1375, %v1374
    %1392 = vmatprep.subr.bf16.mxu0 0
    %1393 = vmatpush1.bf16.msra.mxu0 %v1383
    %1394 = vmatprep.subr.bf16.mxu0 0
    %1395 = vmatpush1.bf16.msra.mxu0 %v1382
    %1396 = vmatprep.subr.bf16.mxu0 0
    %1397 = vmatpush1.bf16.msra.mxu0 %v1381
    %1398 = vmatprep.subr.bf16.mxu0 0
    %1399 = vmatpush1.bf16.msra.mxu0 %v1380
    %1400 = vmatprep.subr.bf16.mxu0 0
    %1401 = vmatpush1.bf16.msra.mxu0 %v1379
    %1402 = vmatprep.subr.bf16.mxu0 0
    %1403 = vmatpush1.bf16.msra.mxu0 %v1378
    %1404 = vmatprep.subr.bf16.mxu0 0
    %1405 = vmatpush1.bf16.msra.mxu0 %v1377
    %1406 = vmatprep.subr.bf16.mxu0 0
    %1407 = vmatpush1.bf16.msra.mxu0 %v1376
    %1408 = vmatprep.subr.bf16.mxu0 0
    %1409 = vmatpush2.bf16.msra.mxu0 0
    %1410 = vmatprep.subr.bf16.mxu0 0
    %1411 = vmatpush2.bf16.msra.mxu0 0
    %1412 = vmatprep.subr.bf16.mxu0 0
    %1413 = vmatpush2.bf16.msra.mxu0 0
    %1414 = vmatprep.subr.bf16.mxu0 0
    %1415 = vmatpush2.bf16.msra.mxu0 0
    %1416 = vmatprep.subr.bf16.mxu0 0
    %1417 = vmatpush2.bf16.msra.mxu0 0
    %1418 = vmatprep.subr.bf16.mxu0 0
    %1419 = vmatpush2.bf16.msra.mxu0 0
    %1420 = vmatprep.subr.bf16.mxu0 0
    %1421 = vmatpush2.bf16.msra.mxu0 0
    %1422 = vmatprep.subr.bf16.mxu0 0
    %1423 = vmatpush2.bf16.msra.mxu0 0
    %1424 = vmatprep.mubr.bf16.mxu0 0
    %1425 = vmatmul.mubr.bf16.gmra.mxu0 %v1318
    %v1426 = vpop.f32.mrf.mxu0
    %v1427 = vadd.f32 %v1342, %v1426
    %v1428 = vpop.f32.mrf.mxu0
    %v1429 = vpop.f32.mrf.mxu0
    %v1430 = vpop.f32.mrf.mxu0
    %1431 = vdwg.mxu0
    %vm1432 = vcmask 982016
    %1433 = vst.msk [vmem:[#allocation8] sm:$0xff] %vm1432, %v1427
    // Predicated region
    $region26: #{tpu_custom_call.1} parent=1 // pred_check
      _
    $region27: #{tpu_custom_call.1} parent=1 // pred_check_branch
      %1435 = sbr.rel (0) target = $region29
    $region28: #{tpu_custom_call.1} parent=1 // pred_region
      %s1437 = ssub.s32 128, 128
      %1438 = vsyncadd [#allocation4], %s1437
      %s1440 = sshll.u32 [#allocation8], 4
      %s1441 = int_to_ptr.vmem [resolvable:$true] %s1440
      %1443 = dma.vmem_to_hbm [thread:$0]  %s1441, 128, %s3, [#allocation4]
    $region29: #{tpu_custom_call.1} parent=1 // pred_fallthru
      _
    // Predicated region
    $region30: #{tpu_custom_call.1} parent=1 // pred_check
      _
    $region31: #{tpu_custom_call.1} parent=1 // pred_check_branch
      %1445 = sbr.rel (0) target = $region33
    $region32: #{tpu_custom_call.1} parent=1 // pred_region
      %1446 = dma.done [#allocation4], 128
    $region33: #{tpu_custom_call.1} parent=1 // pred_fallthru
      _
    %1447 = vsyncpa [#allocation3], 1
    %1448 = vsyncpa [#allocation6], 1
    %1449 = vsyncpa [#allocation4], 1

</llo_original>
